<compile_context>
chip_gen: v7x
topology: tpu7x:2x2x1
jax: 0.10.0
libtpu: 0.0.40
codegen_flags: <defaults>
</compile_context>

<pallas_src>
import functools
import math

import jax
import jax.numpy as jnp
from jax.experimental import pallas as pl
from jax.experimental.pallas import tpu as pltpu


# ----------------------------------------------------------------------------
# Pallas kernels
# ----------------------------------------------------------------------------
def _make_mm_kernel(has_scale, has_res, relu):
    """Fused matmul + affine(+residual)(+ReLU) kernel.

    Ref order: a, b, [scale], bias, [residual], out, acc_scratch.
    Operands are bf16; accumulation and the epilogue stay in f32 (the fast
    path on v5e/v6e/v7x); the final store casts to the bf16 output dtype.
    """

    def kernel(*refs):
        a_ref, b_ref = refs[0], refs[1]
        i = 2
        s_ref = None
        if has_scale:
            s_ref = refs[i]
            i += 1
        c_ref = refs[i]
        i += 1
        r_ref = None
        if has_res:
            r_ref = refs[i]
            i += 1
        o_ref, acc_ref = refs[i], refs[i + 1]

        @pl.when(pl.program_id(2) == 0)
        def _():
            acc_ref[...] = jnp.zeros_like(acc_ref)

        acc_ref[...] += jnp.dot(a_ref[...], b_ref[...],
                                preferred_element_type=jnp.float32)

        @pl.when(pl.program_id(2) == pl.num_programs(2) - 1)
        def _():
            y = acc_ref[...]
            if has_scale:
                y = y * s_ref[...]
            y = y + c_ref[...]
            if has_res:
                y = y + r_ref[...].astype(jnp.float32)
            if relu:
                y = jnp.maximum(y, 0.0)
            o_ref[...] = y.astype(o_ref.dtype)

    return kernel


def _max9_kernel(x_ref, o_ref):
    # x: (9, tm, L) -> elementwise max over the 9 pooling-window taps.
    o_ref[...] = jnp.max(x_ref[...], axis=0)


def _avg_kernel(x_ref, o_ref):
    # x: (tm, win, C) -> mean over the window axis (f32 accumulate).
    x = x_ref[...].astype(jnp.float32)
    o_ref[...] = jnp.mean(x, axis=1)


# ----------------------------------------------------------------------------
# Tiling helpers
# ----------------------------------------------------------------------------
def _round_up(x, m):
    return ((x + m - 1) // m) * m


def _pick_div(dim, candidates):
    for t in candidates:
        if dim % t == 0:
            return t
    return None


def _pick_tm(m, cap=512):
    """Largest multiple-of-8 tile <= cap dividing round_up(m, 8) (no M waste)."""
    m8 = _round_up(m, 8)
    t = min(m8, cap)
    t -= t % 8
    while t >= 8:
        if m8 % t == 0:
            return t, m8
        t -= 8
    return 8, m8


def _pick_tk(k):
    if k % 128 == 0:
        if k <= 1536:
            return k
        return _pick_div(k, (1152, 1024, 768, 512, 384, 256, 128))
    return k  # full-extent K block (exempt from the 128-divisibility rule)


def _pick_tn(n):
    if n % 128 == 0:
        return _pick_div(n, (512, 384, 256, 128))
    return n  # full-extent N block (only N=64 / N=2 here)


# ----------------------------------------------------------------------------
# Pallas wrappers
# ----------------------------------------------------------------------------
@functools.partial(jax.jit, static_argnames=("relu",))
def matmul_affine(a, w, bias, scale=None, residual=None, *, relu=False):
    """out = act((a @ w) [* scale] + bias [+ residual]) in one Pallas kernel.

    a: (M, K), w: (K, N) bf16, bias/scale: (N,) f32, residual: (M, N).
    Output: (M, N) bf16.
    """
    M, K = a.shape
    Kw, N = w.shape
    assert Kw == K

    a = a.astype(jnp.bfloat16)
    w = w.astype(jnp.bfloat16)

    tm, Mp = _pick_tm(M)
    tk = _pick_tk(K)
    tn = _pick_tn(N)

    if Mp != M:
        a = jnp.pad(a, ((0, Mp - M), (0, 0)))

    in_specs = [pl.BlockSpec((tm, tk), lambda i, j, k: (i, k)),
                pl.BlockSpec((tk, tn), lambda i, j, k: (k, j))]
    args = [a, w]
    if scale is not None:
        in_specs.append(pl.BlockSpec((1, tn), lambda i, j, k: (0, j)))
        args.append(scale.astype(jnp.float32).reshape(1, N))
    in_specs.append(pl.BlockSpec((1, tn), lambda i, j, k: (0, j)))
    args.append(bias.astype(jnp.float32).reshape(1, N))
    if residual is not None:
        r = residual.astype(jnp.bfloat16)
        if Mp != M:
            r = jnp.pad(r, ((0, Mp - M), (0, 0)))
        in_specs.append(pl.BlockSpec((tm, tn), lambda i, j, k: (i, j)))
        args.append(r)

    kernel = _make_mm_kernel(scale is not None, residual is not None, relu)
    out = pl.pallas_call(
        kernel,
        out_shape=jax.ShapeDtypeStruct((Mp, N), jnp.bfloat16),
        grid_spec=pltpu.PrefetchScalarGridSpec(
            num_scalar_prefetch=0,
            grid=(Mp // tm, N // tn, K // tk),
            in_specs=in_specs,
            out_specs=pl.BlockSpec((tm, tn), lambda i, j, k: (i, j)),
            scratch_shapes=[pltpu.VMEM((tm, tn), jnp.float32)],
        ),
        compiler_params=pltpu.CompilerParams(
            dimension_semantics=("parallel", "parallel", "arbitrary")),
    )(*args)
    if Mp != M:
        out = out[:M]
    return out


@jax.jit
def maxpool_3s2p1(x):
    """MaxPool2d(3, stride=2, pad=1) on NHWC: elementwise max over the 9
    shifted strided views, reshaped to a lane-dense (rows, Wo*C) layout."""
    N, H, W, C = x.shape
    Ho = (H + 2 - 3) // 2 + 1
    Wo = (W + 2 - 3) // 2 + 1
    neg = float("-inf")
    xp = jnp.pad(x, ((0, 0), (1, 1), (1, 1), (0, 0)), constant_values=neg)
    views = []
    for i in range(3):
        for j in range(3):
            v = xp[:, i:i + 2 * Ho:2, j:j + 2 * Wo:2, :]
            views.append(v.reshape(N * Ho, Wo * C))
    stk = jnp.stack(views, axis=0)                       # (9, N*Ho, Wo*C)
    M, L = N * Ho, Wo * C
    tm, Mp = _pick_tm(M, 256)
    if Mp != M:
        stk = jnp.pad(stk, ((0, 0), (0, Mp - M), (0, 0)), constant_values=neg)
    out = pl.pallas_call(
        _max9_kernel,
        out_shape=jax.ShapeDtypeStruct((Mp, L), x.dtype),
        grid=(Mp // tm,),
        in_specs=[pl.BlockSpec((9, tm, L), lambda i: (0, i, 0))],
        out_specs=pl.BlockSpec((tm, L), lambda i: (i, 0)),
    )(stk)
    return out[:M].reshape(N, Ho, Wo, C)


@jax.jit
def avgpool_all(x):
    # AvgPool2d(4, stride=1) on a 4x4 feature map == mean over all 16 positions.
    N, H, W, C = x.shape
    xr = x.reshape(N, H * W, C)
    tm, Mp = _pick_tm(N, 256)
    if Mp != N:
        xr = jnp.pad(xr, ((0, Mp - N), (0, 0), (0, 0)))
    out = pl.pallas_call(
        _avg_kernel,
        out_shape=jax.ShapeDtypeStruct((Mp, C), jnp.float32),
        grid=(Mp // tm,),
        in_specs=[pl.BlockSpec((tm, H * W, C), lambda i: (i, 0, 0))],
        out_specs=pl.BlockSpec((tm, C), lambda i: (i, 0)),
    )(xr)
    return out[:N]


# ----------------------------------------------------------------------------
# JAX glue: im2col + layer helpers
# ----------------------------------------------------------------------------
def _im2col(x, kh, kw, stride, pad):
    # x: (N, H, W, C) bf16 -> (N*Ho*Wo, kh*kw*C), tap-major / channel-minor.
    # TODO(synk): the 3x3-conv im2col is still materialized in HBM (bf16);
    # fusing the 9 taps into the matmul grid would remove that traffic.
    N, H, W, C = x.shape
    if pad:
        x = jnp.pad(x, ((0, 0), (pad, pad), (pad, pad), (0, 0)))
    Ho = (H + 2 * pad - kh) // stride + 1
    Wo = (W + 2 * pad - kw) // stride + 1
    cols = []
    for i in range(kh):
        for j in range(kw):
            cols.append(x[:, i:i + stride * Ho:stride,
                           j:j + stride * Wo:stride, :])
    p = jnp.stack(cols, axis=3)                          # (N, Ho, Wo, kh*kw, C)
    return p.reshape(N * Ho * Wo, kh * kw * C), Ho, Wo


@functools.partial(jax.jit,
                   static_argnames=("kh", "kw", "stride", "pad", "relu"))
def conv_bn_act(x, w_mat, scale, bias, residual=None, *,
                kh, kw, stride=1, pad=0, relu=True):
    # x: (N, H, W, Cin) bf16; w_mat: (kh*kw*Cin, Cout) bf16 (pre-transposed).
    N, H, W, Cin = x.shape
    Cout = w_mat.shape[1]
    if (kh, kw, stride, pad) == (1, 1, 1, 0):
        a, Ho, Wo = x.reshape(N * H * W, Cin), H, W
    else:
        a, Ho, Wo = _im2col(x, kh, kw, stride, pad)
    r = None if residual is None else residual.reshape(-1, Cout)
    out = matmul_affine(a, w_mat, bias, scale=scale, residual=r, relu=relu)
    return out.reshape(N, Ho, Wo, Cout)


@functools.partial(jax.jit, static_argnames=("relu",))
def conv1d_k3p1(x, w_mat, b, *, relu=True):
    # x: (B, L, Cin); w_mat: (3*Cin, Cout) bf16; padding=1 along L.
    B, L, Cin = x.shape
    Cout = w_mat.shape[1]
    xp = jnp.pad(x.astype(jnp.bfloat16), ((0, 0), (1, 1), (0, 0)))
    a = jnp.stack([xp[:, i:i + L, :] for i in range(3)],
                  axis=2).reshape(B * L, 3 * Cin)
    out = matmul_affine(a, w_mat, b, scale=None, relu=relu)
    return out.reshape(B, L, Cout)


# ----------------------------------------------------------------------------
# Deterministic parameter construction (weights pre-transposed, bf16)
# ----------------------------------------------------------------------------
_BN_EPS = 1e-5
_STAGE_CFG = ((64, 3, 1), (128, 4, 2), (256, 6, 2), (512, 3, 2))


class _KeyGen:
    def __init__(self, key):
        self.key = key
        self.i = 0

    def __call__(self):
        self.i += 1
        return jax.random.fold_in(self.key, self.i)


def _conv_mat(key, cout, cin, kh, kw):
    # PyTorch init (OIHW normal, std=sqrt(2/n)); stored as (kh*kw*cin, cout) bf16.
    n = kh * kw * cout
    w = jax.random.normal(key, (cout, cin, kh, kw), jnp.float32) * math.sqrt(2.0 / n)
    return jnp.transpose(w, (2, 3, 1, 0)).reshape(kh * kw * cin, cout).astype(jnp.bfloat16)


def _lin_mat(key, cout, cin):
    n = cout * cin
    w = jax.random.normal(key, (cout, cin), jnp.float32) * math.sqrt(2.0 / n)
    return jnp.transpose(w).astype(jnp.bfloat16)         # (cin, cout)


def _conv1d_mat(key, cout, cin):
    w = jax.random.normal(key, (cout, cin, 3), jnp.float32) * math.sqrt(2.0 / (3 * cout))
    return jnp.transpose(w, (2, 1, 0)).reshape(3 * cin, cout).astype(jnp.bfloat16)


def _bn_affine(c):
    # Eval-mode fold of BatchNorm (gamma=1, beta=0, running_mean=0, running_var=1).
    scale = jnp.full((c,), 1.0 / math.sqrt(1.0 + _BN_EPS), jnp.float32)
    bias = jnp.zeros((c,), jnp.float32)
    return scale, bias


def make_params(key, planes_out=144 * 8, n_class=2):
    kg = _KeyGen(key)
    p = {"conv1": _conv_mat(kg(), 64, 6, 7, 7), "bn1": _bn_affine(64)}

    stacks = []
    inplanes = 64
    for planes, blocks, stride in _STAGE_CFG:
        blk_list = []
        for b in range(blocks):
            s = stride if b == 0 else 1
            blk = {
                "conv1": _conv_mat(kg(), planes, inplanes, 1, 1),
                "bn1": _bn_affine(planes),
                "conv2": _conv_mat(kg(), planes, planes, 3, 3),
                "bn2": _bn_affine(planes),
                "conv3": _conv_mat(kg(), planes * 4, planes, 1, 1),
                "bn3": _bn_affine(planes * 4),
            }
            if b == 0 and (s != 1 or inplanes != planes * 4):
                blk["down_conv"] = _conv_mat(kg(), planes * 4, inplanes, 1, 1)
                blk["down_bn"] = _bn_affine(planes * 4)
            blk_list.append(blk)
            inplanes = planes * 4
        stacks.append(blk_list)
    p["stacks"] = stacks

    feat = 512 * 4  # 2048
    p["cla_fea_w"] = _lin_mat(kg(), feat, feat)
    p["cla_fea_b"] = jnp.zeros((feat,), jnp.float32)
    p["cla_term_w"] = _lin_mat(kg(), planes_out, feat)
    p["cla_term_b"] = jnp.zeros((planes_out,), jnp.float32)

    c_hand = 144 * 8
    bound = 1.0 / math.sqrt(3 * c_hand)
    p["hand1_w"] = _conv1d_mat(kg(), c_hand, c_hand)
    p["hand1_b"] = jax.random.uniform(kg(), (c_hand,), jnp.float32, -bound, bound)
    p["hand2_w"] = _conv1d_mat(kg(), n_class, c_hand)
    p["hand2_b"] = jax.random.uniform(kg(), (n_class,), jnp.float32, -bound, bound)
    return p


# ----------------------------------------------------------------------------
# Forward pass
# ----------------------------------------------------------------------------
def _bottleneck(blk, x, stride):
    if "down_conv" in blk:
        residual = conv_bn_act(x, blk["down_conv"], *blk["down_bn"],
                               kh=1, kw=1, stride=stride, pad=0, relu=False)
    else:
        residual = x
    out = conv_bn_act(x, blk["conv1"], *blk["bn1"],
                      kh=1, kw=1, stride=1, pad=0, relu=True)
    out = conv_bn_act(out, blk["conv2"], *blk["bn2"],
                      kh=3, kw=3, stride=stride, pad=1, relu=True)
    out = conv_bn_act(out, blk["conv3"], *blk["bn3"], residual,
                      kh=1, kw=1, stride=1, pad=0, relu=True)
    return out


def encoder_forward(p, x_nchw):
    # x: (N, 6, H, W) f32 -> (N, planes_out)
    x = jnp.transpose(x_nchw, (0, 2, 3, 1)).astype(jnp.bfloat16)  # NHWC bf16
    x = conv_bn_act(x, p["conv1"], *p["bn1"],
                    kh=7, kw=7, stride=2, pad=3, relu=True)
    x = maxpool_3s2p1(x)
    for (planes, blocks, stride), blk_list in zip(_STAGE_CFG, p["stacks"]):
        for b, blk in enumerate(blk_list):
            x = _bottleneck(blk, x, stride if b == 0 else 1)
    N, H, W, C = x.shape
    assert H == 4 and W == 4, "avgpool(4, stride=1) expects a 4x4 feature map"
    avg = avgpool_all(x)                                          # (N, 2048) f32
    cla_fea = matmul_affine(avg, p["cla_fea_w"], p["cla_fea_b"], relu=False)
    cla = matmul_affine(cla_fea, p["cla_term_w"], p["cla_term_b"], relu=False)
    return cla


@jax.jit
def model_forward(p, x):
    # x: (B, L*6, H, W) -> (B, L, n_class)
    B, LC, H, W = x.shape
    L = LC // 6
    frames = x.reshape(B * L, 6, H, W)
    feat = encoder_forward(p, frames)              # (B*L, 1152)
    feat = feat.reshape(B, L, 144 * 8)
    h = conv1d_k3p1(feat, p["hand1_w"], p["hand1_b"], relu=True)
    h = conv1d_k3p1(h, p["hand2_w"], p["hand2_b"], relu=True)
    return h.astype(jnp.float32)                   # (B, L, n_class)


# ----------------------------------------------------------------------------
# Main
# ----------------------------------------------------------------------------
if __name__ == "__main__":
    key = jax.random.PRNGKey(0)
    pkey, xkey = jax.random.split(key)

    params = make_params(pkey)

    # Smallest shapes consistent with the module: spatial 120 (per the name),
    # 2 frames of 6 channels each.
    B, L, S = 1, 2, 120
    x = jax.random.normal(xkey, (B, L * 6, S, S), jnp.float32)

    out = model_forward(params, x)
    out = jax.block_until_ready(out)
    assert out.shape == (B, L, 2), out.shape
    assert bool(jnp.all(jnp.isfinite(out)))
    print("KERNEL_OK")
</pallas_src>

<mosaic_0001>
module attributes {stable_mosaic.version = 11 : i64} {
  func.func @kernel(%arg0: i32, %arg1: i32, %arg2: i32, %arg3: memref<480x294xbf16, #tpu.memory_space<vmem>>, %arg4: memref<294x64xbf16, #tpu.memory_space<vmem>>, %arg5: memref<1x64xf32, #tpu.memory_space<vmem>>, %arg6: memref<1x64xf32, #tpu.memory_space<vmem>>, %arg7: memref<480x64xbf16, #tpu.memory_space<vmem>>, %arg8: memref<480x64xf32, #tpu.memory_space<vmem>>) attributes {dimension_semantics = [#tpu.dimension_semantics<parallel>, #tpu.dimension_semantics<parallel>, #tpu.dimension_semantics<arbitrary>], iteration_bounds = array<i64: 15, 1, 1>, scalar_prefetch = 0 : i64, scratch_operands = 1 : i64, tpu.core_type = #tpu.core_type<tc>, window_params = [{transform_indices = @transform_0, window_bounds = array<i64: 480, 294>}, {transform_indices = @transform_1, window_bounds = array<i64: 294, 64>}, {transform_indices = @transform_2, window_bounds = array<i64: 1, 64>}, {transform_indices = @transform_3, window_bounds = array<i64: 1, 64>}, {transform_indices = @transform_4, window_bounds = array<i64: 480, 64>}]} {
    %c0_i32 = arith.constant 0 : i32
    %0 = arith.cmpi eq, %arg2, %c0_i32 : i32
    %1 = arith.extui %0 : i1 to i32
    %c0_i32_0 = arith.constant 0 : i32
    %2 = arith.cmpi ne, %1, %c0_i32_0 : i32
    scf.if %2 {
      %cst_10 = arith.constant 0.000000e+00 : f32
      %12 = vector.broadcast %cst_10 : f32 to vector<480x64xf32>
      %c0_11 = arith.constant 0 : index
      %c0_12 = arith.constant 0 : index
      %13 = vector.load %arg8[%c0_11, %c0_12] : memref<480x64xf32, #tpu.memory_space<vmem>>, vector<480x64xf32>
      tpu.vector_store %arg8[%c0_11, %c0_12], %12 {strides = array<i32>} : memref<480x64xf32, #tpu.memory_space<vmem>>, vector<480x64xf32>,
    } else {
    }
    %c0 = arith.constant 0 : index
    %c0_1 = arith.constant 0 : index
    %3 = vector.load %arg8[%c0, %c0_1] : memref<480x64xf32, #tpu.memory_space<vmem>>, vector<480x64xf32>
    %c0_2 = arith.constant 0 : index
    %c0_3 = arith.constant 0 : index
    %4 = vector.load %arg3[%c0_2, %c0_3] : memref<480x294xbf16, #tpu.memory_space<vmem>>, vector<480x294xbf16>
    %c0_4 = arith.constant 0 : index
    %c0_5 = arith.constant 0 : index
    %5 = vector.load %arg4[%c0_4, %c0_5] : memref<294x64xbf16, #tpu.memory_space<vmem>>, vector<294x64xbf16>
    %cst = arith.constant dense<0.000000e+00> : vector<480x64xf32>
    %6 = tpu.matmul %4, %5, %cst {dimension_numbers = #tpu.dot_dimension_numbers<[1], [0], [0], [1], [0, 0, 1, 1], [], []>} : vector<480x294xbf16>, vector<294x64xbf16>, vector<480x64xf32> -> vector<480x64xf32>
    %7 = arith.addf %3, %6 : vector<480x64xf32>
    %c0_6 = arith.constant 0 : index
    %c0_7 = arith.constant 0 : index
    %8 = vector.load %arg8[%c0_6, %c0_7] : memref<480x64xf32, #tpu.memory_space<vmem>>, vector<480x64xf32>
    tpu.vector_store %arg8[%c0_6, %c0_7], %7 {strides = array<i32>} : memref<480x64xf32, #tpu.memory_space<vmem>>, vector<480x64xf32>,
    %c0_i32_8 = arith.constant 0 : i32
    %9 = arith.cmpi eq, %arg2, %c0_i32_8 : i32
    %10 = arith.extui %9 : i1 to i32
    %c0_i32_9 = arith.constant 0 : i32
    %11 = arith.cmpi ne, %10, %c0_i32_9 : i32
    scf.if %11 {
      %c0_10 = arith.constant 0 : index
      %c0_11 = arith.constant 0 : index
      %12 = vector.load %arg8[%c0_10, %c0_11] : memref<480x64xf32, #tpu.memory_space<vmem>>, vector<480x64xf32>
      %c0_12 = arith.constant 0 : index
      %c0_13 = arith.constant 0 : index
      %13 = vector.load %arg5[%c0_12, %c0_13] : memref<1x64xf32, #tpu.memory_space<vmem>>, vector<1x64xf32>
      %14 = vector.broadcast %13 : vector<1x64xf32> to vector<480x64xf32>
      %15 = arith.mulf %12, %14 : vector<480x64xf32>
      %c0_14 = arith.constant 0 : index
      %c0_15 = arith.constant 0 : index
      %16 = vector.load %arg6[%c0_14, %c0_15] : memref<1x64xf32, #tpu.memory_space<vmem>>, vector<1x64xf32>
      %17 = vector.broadcast %16 : vector<1x64xf32> to vector<480x64xf32>
      %18 = arith.addf %15, %17 : vector<480x64xf32>
      %cst_16 = arith.constant 0.000000e+00 : f32
      %19 = vector.broadcast %cst_16 : f32 to vector<480x64xf32>
      %20 = arith.maximumf %18, %19 : vector<480x64xf32>
      %21 = arith.truncf %20 : vector<480x64xf32> to vector<480x64xbf16>
      %c0_17 = arith.constant 0 : index
      %c0_18 = arith.constant 0 : index
      %22 = vector.load %arg7[%c0_17, %c0_18] : memref<480x64xbf16, #tpu.memory_space<vmem>>, vector<480x64xbf16>
      tpu.vector_store %arg7[%c0_17, %c0_18], %21 {strides = array<i32>} : memref<480x64xbf16, #tpu.memory_space<vmem>>, vector<480x64xbf16>,
    } else {
    }
    return
  }
  func.func @transform_0(%arg0: i32, %arg1: i32, %arg2: i32) -> (i32, i32) {
    %c0_i32 = arith.constant 0 : i32
    return %arg0, %arg2 : i32, i32
  }
  func.func @transform_1(%arg0: i32, %arg1: i32, %arg2: i32) -> (i32, i32) {
    %c0_i32 = arith.constant 0 : i32
    return %arg2, %arg1 : i32, i32
  }
  func.func @transform_2(%arg0: i32, %arg1: i32, %arg2: i32) -> (i32, i32) {
    %c0_i32 = arith.constant 0 : i32
    %c0_i32_0 = arith.constant 0 : i32
    return %c0_i32, %arg1 : i32, i32
  }
  func.func @transform_3(%arg0: i32, %arg1: i32, %arg2: i32) -> (i32, i32) {
    %c0_i32 = arith.constant 0 : i32
    %c0_i32_0 = arith.constant 0 : i32
    return %c0_i32, %arg1 : i32, i32
  }
  func.func @transform_4(%arg0: i32, %arg1: i32, %arg2: i32) -> (i32, i32) {
    %c0_i32 = arith.constant 0 : i32
    return %arg0, %arg1 : i32, i32
  }
}

</mosaic_0001>

<llo_original>
// kernel: matmul_affine.1
$region0: #{matmul_affine.1}
  #allocation0 [shape = 'u32[]', space=smem, size = 0x4, offset = 0x4, fixed_abs, tag = 'smem constant byte address 0x4 - core index']
  #allocation1 [shape = 'u32[144,128]{1,0:T(1,128)}', space=vmem, size = 0x12000, scoped, tag = 'internal scratch']
  #allocation2 [shape = 'f32[480,64]{1,0:T(8,128)}', space=vmem, size = 0x3c000, scoped, tag = 'scratch operand']
  %s0 = inlined_call_operand.vmem [shape: bf16[7200,294], index: 0, kind: input, shape index: {}]
  %s1 = inlined_call_operand.vmem [shape: bf16[294,64], index: 1, kind: input, shape index: {}]
  %s2 = inlined_call_operand.vmem [shape: f32[1,64], index: 2, kind: input, shape index: {}]
  %s3 = inlined_call_operand.vmem [shape: f32[1,64], index: 3, kind: input, shape index: {}]
  %s4 = inlined_call_operand.vmem [shape: bf16[7200,64], index: 4, kind: output, shape index: {}]
  %s5 = sld [smem:[#allocation0]]
  $region57: #{matmul_affine.1} parent=0
    _
  %s7 = ssub.s32 1, %s5
  %s8 = scalar_select 0, %s7, %s5
  loop: start=0, step=1, limit=17
  $region2: #{matmul_affine.1} parent=0 // loop_pre_header
    _
  $region3: #{matmul_affine.1} parent=0 // loop_header
    %s10 = sphi 0, %s14
    %p11 = scmp.ge.s32.totalorder %s10, 17
    %s17 = sphi 0, %s36
    %s18 = sphi 0, %s32
    %s19 = sphi 0, %s28
    %s20 = sphi 0, %s17
    %s21 = sphi 0, %s18
    %s22 = sphi 0, %s19
    %s23 = sphi 0, %s20
    %s24 = sphi 0, %s21
    %s25 = sphi 0, %s22
    %s41 = sphi 0, %s43
    %s44 = sphi 0, %s41
    %s45 = sphi 0, %s44
    %s61 = sphi 0, %s45
    %s69 = sphi 0, %s71
    %s72 = sphi 0, %s69
    %s73 = sphi 0, %s72
    %s89 = sphi 0, %s73
    %s95 = sphi 0, %s97
    %s98 = sphi 0, %s95
    %s99 = sphi 0, %s98
    %s115 = sphi 0, %s99
    %s121 = sphi 0, %s123
    %s124 = sphi 0, %s121
    %s125 = sphi 0, %s124
    %s141 = sphi 0, %s125
    %s149 = sphi 0, %s151
    %s152 = sphi 0, %s149
    %s153 = sphi 0, %s152
    %s169 = sphi 0, %s153
  $region4: #{matmul_affine.1} parent=0 // loop_header_branch
    %13 = sbr.rel (%p11) target = $region8
  $region5: #{matmul_affine.1} parent=0 // loop_body
    %s15 = ssub.s32 %s10, 1
    %s16 = ssub.s32 %s10, 2
    %s26 = sadd.s32 1, %s19
    %p27 = scmp.ge.s32.totalorder %s26, 1
    %s28 = scalar_select %p27, 0, %s26
    %s29 = sadd.s32 1, %s18
    %s30 = scalar_select %p27, %s29, %s18
    %p31 = scmp.ge.s32.totalorder %s30, 1
    %s32 = scalar_select %p31, 0, %s30
    %s33 = sadd.s32 1, %s17
    %s34 = scalar_select %p31, %s33, %s17
    %p35 = scmp.ge.s32.totalorder %s34, 15
    %s36 = scalar_select %p35, 0, %s34
    %s37 = ssub.s32 %s17, %s36
    %s38 = ssub.s32 %s19, %s28
    %s39 = sor.u32 %s37, %s38
    %p40 = scmp.eq.s32.totalorder %s39, 0
    %s42 = sadd.s32 %s41, 1
    %s43 = scalar_select %p40, %s41, %s42
    %p46 = pneg %p40
    %p47 = scmp.eq.s32.totalorder %s10, 14
    %p48 = por %p46, %p47
    %p49 = scmp.ne.s32.totalorder %s41, %s44
    %p50 = scmp.eq.s32.totalorder %s10, 0
    %p51 = por %p49, %p50
    %p52 = scmp.ne.s32.totalorder %s41, %s44
    %p53 = scmp.eq.s32.totalorder %s15, 14
    %p54 = por %p52, %p53
    %p55 = scmp.ne.s32.totalorder %s44, %s45
    %p56 = scmp.eq.s32.totalorder %s15, 0
    %p57 = por %p55, %p56
    %p58 = scmp.ne.s32.totalorder %s44, %s45
    %p59 = scmp.eq.s32.totalorder %s16, 14
    %p60 = por %p58, %p59
    %p62 = scmp.ne.s32.totalorder %s45, %s61
    %p63 = scmp.eq.s32.totalorder %s16, 0
    %p64 = por %p62, %p63
    %s65 = ssub.s32 %s19, %s28
    %s66 = ssub.s32 %s18, %s32
    %s67 = sor.u32 %s65, %s66
    %p68 = scmp.eq.s32.totalorder %s67, 0
    %s70 = sadd.s32 %s69, 1
    %s71 = scalar_select %p68, %s69, %s70
    %p74 = pneg %p68
    %p75 = scmp.eq.s32.totalorder %s10, 14
    %p76 = por %p74, %p75
    %p77 = scmp.ne.s32.totalorder %s69, %s72
    %p78 = scmp.eq.s32.totalorder %s10, 0
    %p79 = por %p77, %p78
    %p80 = scmp.ne.s32.totalorder %s69, %s72
    %p81 = scmp.eq.s32.totalorder %s15, 14
    %p82 = por %p80, %p81
    %p83 = scmp.ne.s32.totalorder %s72, %s73
    %p84 = scmp.eq.s32.totalorder %s15, 0
    %p85 = por %p83, %p84
    %p86 = scmp.ne.s32.totalorder %s72, %s73
    %p87 = scmp.eq.s32.totalorder %s16, 14
    %p88 = por %p86, %p87
    %p90 = scmp.ne.s32.totalorder %s73, %s89
    %p91 = scmp.eq.s32.totalorder %s16, 0
    %p92 = por %p90, %p91
    %s93 = ssub.s32 %s18, %s32
    %p94 = scmp.eq.s32.totalorder %s93, 0
    %s96 = sadd.s32 %s95, 1
    %s97 = scalar_select %p94, %s95, %s96
    %p100 = pneg %p94
    %p101 = scmp.eq.s32.totalorder %s10, 14
    %p102 = por %p100, %p101
    %p103 = scmp.ne.s32.totalorder %s95, %s98
    %p104 = scmp.eq.s32.totalorder %s10, 0
    %p105 = por %p103, %p104
    %p106 = scmp.ne.s32.totalorder %s95, %s98
    %p107 = scmp.eq.s32.totalorder %s15, 14
    %p108 = por %p106, %p107
    %p109 = scmp.ne.s32.totalorder %s98, %s99
    %p110 = scmp.eq.s32.totalorder %s15, 0
    %p111 = por %p109, %p110
    %p112 = scmp.ne.s32.totalorder %s98, %s99
    %p113 = scmp.eq.s32.totalorder %s16, 14
    %p114 = por %p112, %p113
    %p116 = scmp.ne.s32.totalorder %s99, %s115
    %p117 = scmp.eq.s32.totalorder %s16, 0
    %p118 = por %p116, %p117
    %s119 = ssub.s32 %s18, %s32
    %p120 = scmp.eq.s32.totalorder %s119, 0
    %s122 = sadd.s32 %s121, 1
    %s123 = scalar_select %p120, %s121, %s122
    %p126 = pneg %p120
    %p127 = scmp.eq.s32.totalorder %s10, 14
    %p128 = por %p126, %p127
    %p129 = scmp.ne.s32.totalorder %s121, %s124
    %p130 = scmp.eq.s32.totalorder %s10, 0
    %p131 = por %p129, %p130
    %p132 = scmp.ne.s32.totalorder %s121, %s124
    %p133 = scmp.eq.s32.totalorder %s15, 14
    %p134 = por %p132, %p133
    %p135 = scmp.ne.s32.totalorder %s124, %s125
    %p136 = scmp.eq.s32.totalorder %s15, 0
    %p137 = por %p135, %p136
    %p138 = scmp.ne.s32.totalorder %s124, %s125
    %p139 = scmp.eq.s32.totalorder %s16, 14
    %p140 = por %p138, %p139
    %p142 = scmp.ne.s32.totalorder %s125, %s141
    %p143 = scmp.eq.s32.totalorder %s16, 0
    %p144 = por %p142, %p143
    %s145 = ssub.s32 %s17, %s36
    %s146 = ssub.s32 %s18, %s32
    %s147 = sor.u32 %s145, %s146
    %p148 = scmp.eq.s32.totalorder %s147, 0
    %s150 = sadd.s32 %s149, 1
    %s151 = scalar_select %p148, %s149, %s150
    %p154 = pneg %p148
    %p155 = scmp.eq.s32.totalorder %s10, 14
    %p156 = por %p154, %p155
    %p157 = scmp.ne.s32.totalorder %s149, %s152
    %p158 = scmp.eq.s32.totalorder %s10, 0
    %p159 = por %p157, %p158
    %p160 = scmp.ne.s32.totalorder %s149, %s152
    %p161 = scmp.eq.s32.totalorder %s15, 14
    %p162 = por %p160, %p161
    %p163 = scmp.ne.s32.totalorder %s152, %s153
    %p164 = scmp.eq.s32.totalorder %s15, 0
    %p165 = por %p163, %p164
    %p166 = scmp.ne.s32.totalorder %s152, %s153
    %p167 = scmp.eq.s32.totalorder %s16, 14
    %p168 = por %p166, %p167
    %p170 = scmp.ne.s32.totalorder %s153, %s169
    %p171 = scmp.eq.s32.totalorder %s16, 0
    %p172 = por %p170, %p171
    %p173 = scmp.le.s32.totalorder 1, %s10
    %p174 = scmp.lt.s32.totalorder %s10, 16
    %p175 = pnand %p173, %p174
    %p176 = pneg %p175
    // Predicated region
    $region9: #{matmul_affine.1} parent=5 // pred_check
      _
    $region10: #{matmul_affine.1} parent=5 // pred_check_branch
      %178 = sbr.rel (%p175) target = $region12
    $region11: #{matmul_affine.1} parent=5 // pred_region
      %s179 = ssub.s32 %s10, 1
      // Predicated region
      $region13: #{matmul_affine.1} parent=11 // pred_check
        %p180 = pneg %p85
      $region14: #{matmul_affine.1} parent=11 // pred_check_branch
        %182 = sbr.rel (%p180) target = $region16
      $region15: #{matmul_affine.1} parent=11 // pred_region
        %s183 = smul.u32 37, %s22
        %p184 = scmp.lt.s32.totalorder %s183, 36
        %s185 = scalar_select %p184, %s183, 36
        %p186 = scmp.lt.s32.totalorder %s21, 0
        %s187 = scalar_select %p186, %s21, 0
        %s188 = sadd.s32 %s187, %s185
        %s189 = smul.addr %s188, 4
        %s190 = scalar_lea.vmem %s1, %s189
        %s191 = smul.u32 37, %s22
      $region16: #{matmul_affine.1} parent=11 // pred_fallthru
        _
      // Predicated region
      $region17: #{matmul_affine.1} parent=11 // pred_check
        %p192 = pneg %p111
      $region18: #{matmul_affine.1} parent=11 // pred_check_branch
        %194 = sbr.rel (%p192) target = $region20
      $region19: #{matmul_affine.1} parent=11 // pred_region
        %p195 = scmp.lt.s32.totalorder %s21, 0
        %s196 = scalar_select %p195, %s21, 0
        %s197 = scalar_lea.vmem %s2, %s196
      $region20: #{matmul_affine.1} parent=11 // pred_fallthru
        _
      // Predicated region
      $region21: #{matmul_affine.1} parent=11 // pred_check
        %p198 = pneg %p137
      $region22: #{matmul_affine.1} parent=11 // pred_check_branch
        %200 = sbr.rel (%p198) target = $region24
      $region23: #{matmul_affine.1} parent=11 // pred_region
        %p201 = scmp.lt.s32.totalorder %s21, 0
        %s202 = scalar_select %p201, %s21, 0
        %s203 = scalar_lea.vmem %s3, %s202
      $region24: #{matmul_affine.1} parent=11 // pred_fallthru
        _
    $region12: #{matmul_affine.1} parent=5 // pred_fallthru
      _
    %p204 = scmp.lt.s32.totalorder %s10, 15
    // Predicated region
    $region25: #{matmul_affine.1} parent=5 // pred_check
      %p205 = pneg %p204
    $region26: #{matmul_affine.1} parent=5 // pred_check_branch
      %207 = sbr.rel (%p205) target = $region28
    $region27: #{matmul_affine.1} parent=5 // pred_region
      // Predicated region
      $region29: #{matmul_affine.1} parent=27 // pred_check
        %p208 = pneg %p51
      $region30: #{matmul_affine.1} parent=27 // pred_check_branch
        %210 = sbr.rel (%p208) target = $region32
      $region31: #{matmul_affine.1} parent=27 // pred_region
        %s211 = smul.u32 60, %s17
        %s212 = smul.u32 3, %s19
        %p213 = scmp.lt.s32.totalorder %s211, 899
        %s214 = scalar_select %p213, %s211, 899
        %p215 = scmp.lt.s32.totalorder %s212, 2
        %s216 = scalar_select %p215, %s212, 2
        %s217 = smul.addr %s214, 3
        %s218 = sadd.s32 %s216, %s217
        %s219 = smul.addr %s218, 4
        %s220 = scalar_lea.vmem %s0, %s219
        %s221 = smul.u32 60, %s17
        %s222 = smul.u32 3, %s19
      $region32: #{matmul_affine.1} parent=27 // pred_fallthru
        _
    $region28: #{matmul_affine.1} parent=5 // pred_fallthru
      _
    %p223 = scmp.le.s32.totalorder 1, %s10
    %p224 = scmp.lt.s32.totalorder %s10, 16
    %p225 = pnand %p223, %p224
    %p226 = pneg %p225
    // Predicated region
    $region33: #{matmul_affine.1} parent=5 // pred_check
      _
    $region34: #{matmul_affine.1} parent=5 // pred_check_branch
      %228 = sbr.rel (%p225) target = $region36
    $region35: #{matmul_affine.1} parent=5 // pred_region
      %s229 = ssub.s32 %s10, 1
      %s230 = smul.u32 60, %s20
      %s231 = smul.u32 3, %s22
      %p232 = scmp.lt.s32.totalorder %s230, 899
      %s233 = scalar_select %p232, %s230, 899
      %p234 = scmp.lt.s32.totalorder %s231, 2
      %s235 = scalar_select %p234, %s231, 2
      %s236 = smul.addr %s233, 3
      %s237 = sadd.s32 %s235, %s236
      %s238 = smul.addr %s237, 4
      %s239 = scalar_lea.vmem %s0, %s238
      %p240 = pneg %p57
      %p241 = pneg %p54
      %s242 = smul.u32 37, %s22
      %p243 = scmp.lt.s32.totalorder %s242, 36
      %s244 = scalar_select %p243, %s242, 36
      %p245 = scmp.lt.s32.totalorder %s21, 0
      %s246 = scalar_select %p245, %s21, 0
      %s247 = sadd.s32 %s246, %s244
      %s248 = smul.addr %s247, 4
      %s249 = scalar_lea.vmem %s1, %s248
      %p250 = pneg %p85
      %p251 = pneg %p82
      %p252 = scmp.lt.s32.totalorder %s21, 0
      %s253 = scalar_select %p252, %s21, 0
      %s254 = scalar_lea.vmem %s2, %s253
      %p255 = pneg %p111
      %p256 = pneg %p108
      %p257 = scmp.lt.s32.totalorder %s21, 0
      %s258 = scalar_select %p257, %s21, 0
      %s259 = scalar_lea.vmem %s3, %s258
      %p260 = pneg %p137
      %p261 = pneg %p134
      %p262 = pneg %p165
      %p263 = pneg %p162
      %s264 = smul.u32 60, %s20
      %p265 = scmp.lt.s32.totalorder %s264, 899
      %s266 = scalar_select %p265, %s264, 899
      %p267 = scmp.lt.s32.totalorder %s21, 0
      %s268 = scalar_select %p267, %s21, 0
      %s269 = sadd.s32 %s268, %s266
      %s270 = smul.addr %s269, 4
      %s271 = scalar_lea.vmem %s4, %s270
      %s272 = smul.u32 60, %s20
      %s273 = smul.u32 3, %s22
      %p274 = scmp.lt.s32.totalorder %s272, 899
      %s275 = scalar_select %p274, %s272, 899
      %p276 = scmp.lt.s32.totalorder %s273, 2
      %s277 = scalar_select %p276, %s273, 2
      %s278 = smul.addr %s275, 3
      %s279 = sadd.s32 %s277, %s278
      %s280 = smul.addr %s279, 4
      %s281 = scalar_lea.vmem %s0, %s280
      %s282 = smul.u32 60, %s20
      %s283 = smul.u32 3, %s22
      %s284 = smul.u32 37, %s22
      %p285 = scmp.lt.s32.totalorder %s284, 36
      %s286 = scalar_select %p285, %s284, 36
      %p287 = scmp.lt.s32.totalorder %s21, 0
      %s288 = scalar_select %p287, %s21, 0
      %s289 = sadd.s32 %s288, %s286
      %s290 = smul.addr %s289, 4
      %s291 = scalar_lea.vmem %s1, %s290
      %s292 = smul.u32 37, %s22
      %p293 = scmp.lt.s32.totalorder %s21, 0
      %s294 = scalar_select %p293, %s21, 0
      %s295 = scalar_lea.vmem %s2, %s294
      %p296 = scmp.lt.s32.totalorder %s21, 0
      %s297 = scalar_select %p296, %s21, 0
      %s298 = scalar_lea.vmem %s3, %s297
      %s299 = smul.u32 60, %s20
      %p300 = scmp.lt.s32.totalorder %s299, 899
      %s301 = scalar_select %p300, %s299, 899
      %p302 = scmp.lt.s32.totalorder %s21, 0
      %s303 = scalar_select %p302, %s21, 0
      %s304 = sadd.s32 %s303, %s301
      %s305 = smul.addr %s304, 4
      %s306 = scalar_lea.vmem %s4, %s305
      %s307 = smul.u32 60, %s20
      %p309 = scmp.eq.s32.totalorder %s22, 0
      // Predicated region
      $region37: #{matmul_affine.1} parent=35 // pred_check
        %p310 = pneg %p309
      $region38: #{matmul_affine.1} parent=35 // pred_check_branch
        %312 = sbr.rel (%p310) target = $region40
      $region39: #{matmul_affine.1} parent=35 // pred_region
        %vm313 = vcmask 523264
        %314 = vst.msk [vmem:[#allocation2] sm:$0xff] %vm313, 0.0
        %315 = vst.msk [vmem:[#allocation2 + $0x8] sm:$0xff] %vm313, 0.0
        %316 = vst.msk [vmem:[#allocation2 + $0x10] sm:$0xff] %vm313, 0.0
        %317 = vst.msk [vmem:[#allocation2 + $0x18] sm:$0xff] %vm313, 0.0
        %318 = vst.msk [vmem:[#allocation2 + $0x20] sm:$0xff] %vm313, 0.0
        %319 = vst.msk [vmem:[#allocation2 + $0x28] sm:$0xff] %vm313, 0.0
        %320 = vst.msk [vmem:[#allocation2 + $0x30] sm:$0xff] %vm313, 0.0
        %321 = vst.msk [vmem:[#allocation2 + $0x38] sm:$0xff] %vm313, 0.0
        %322 = vst.msk [vmem:[#allocation2 + $0x40] sm:$0xff] %vm313, 0.0
        %323 = vst.msk [vmem:[#allocation2 + $0x48] sm:$0xff] %vm313, 0.0
        %324 = vst.msk [vmem:[#allocation2 + $0x50] sm:$0xff] %vm313, 0.0
        %325 = vst.msk [vmem:[#allocation2 + $0x58] sm:$0xff] %vm313, 0.0
        %326 = vst.msk [vmem:[#allocation2 + $0x60] sm:$0xff] %vm313, 0.0
        %327 = vst.msk [vmem:[#allocation2 + $0x68] sm:$0xff] %vm313, 0.0
        %328 = vst.msk [vmem:[#allocation2 + $0x70] sm:$0xff] %vm313, 0.0
        %329 = vst.msk [vmem:[#allocation2 + $0x78] sm:$0xff] %vm313, 0.0
        %330 = vst.msk [vmem:[#allocation2 + $0x80] sm:$0xff] %vm313, 0.0
        %331 = vst.msk [vmem:[#allocation2 + $0x88] sm:$0xff] %vm313, 0.0
        %332 = vst.msk [vmem:[#allocation2 + $0x90] sm:$0xff] %vm313, 0.0
        %333 = vst.msk [vmem:[#allocation2 + $0x98] sm:$0xff] %vm313, 0.0
        %334 = vst.msk [vmem:[#allocation2 + $0xa0] sm:$0xff] %vm313, 0.0
        %335 = vst.msk [vmem:[#allocation2 + $0xa8] sm:$0xff] %vm313, 0.0
        %336 = vst.msk [vmem:[#allocation2 + $0xb0] sm:$0xff] %vm313, 0.0
        %337 = vst.msk [vmem:[#allocation2 + $0xb8] sm:$0xff] %vm313, 0.0
        %338 = vst.msk [vmem:[#allocation2 + $0xc0] sm:$0xff] %vm313, 0.0
        %339 = vst.msk [vmem:[#allocation2 + $0xc8] sm:$0xff] %vm313, 0.0
        %340 = vst.msk [vmem:[#allocation2 + $0xd0] sm:$0xff] %vm313, 0.0
        %341 = vst.msk [vmem:[#allocation2 + $0xd8] sm:$0xff] %vm313, 0.0
        %342 = vst.msk [vmem:[#allocation2 + $0xe0] sm:$0xff] %vm313, 0.0
        %343 = vst.msk [vmem:[#allocation2 + $0xe8] sm:$0xff] %vm313, 0.0
        %344 = vst.msk [vmem:[#allocation2 + $0xf0] sm:$0xff] %vm313, 0.0
        %345 = vst.msk [vmem:[#allocation2 + $0xf8] sm:$0xff] %vm313, 0.0
        %346 = vst.msk [vmem:[#allocation2 + $0x100] sm:$0xff] %vm313, 0.0
        %347 = vst.msk [vmem:[#allocation2 + $0x108] sm:$0xff] %vm313, 0.0
        %348 = vst.msk [vmem:[#allocation2 + $0x110] sm:$0xff] %vm313, 0.0
        %349 = vst.msk [vmem:[#allocation2 + $0x118] sm:$0xff] %vm313, 0.0
        %350 = vst.msk [vmem:[#allocation2 + $0x120] sm:$0xff] %vm313, 0.0
        %351 = vst.msk [vmem:[#allocation2 + $0x128] sm:$0xff] %vm313, 0.0
        %352 = vst.msk [vmem:[#allocation2 + $0x130] sm:$0xff] %vm313, 0.0
        %353 = vst.msk [vmem:[#allocation2 + $0x138] sm:$0xff] %vm313, 0.0
        %354 = vst.msk [vmem:[#allocation2 + $0x140] sm:$0xff] %vm313, 0.0
        %355 = vst.msk [vmem:[#allocation2 + $0x148] sm:$0xff] %vm313, 0.0
        %356 = vst.msk [vmem:[#allocation2 + $0x150] sm:$0xff] %vm313, 0.0
        %357 = vst.msk [vmem:[#allocation2 + $0x158] sm:$0xff] %vm313, 0.0
        %358 = vst.msk [vmem:[#allocation2 + $0x160] sm:$0xff] %vm313, 0.0
        %359 = vst.msk [vmem:[#allocation2 + $0x168] sm:$0xff] %vm313, 0.0
        %360 = vst.msk [vmem:[#allocation2 + $0x170] sm:$0xff] %vm313, 0.0
        %361 = vst.msk [vmem:[#allocation2 + $0x178] sm:$0xff] %vm313, 0.0
        %362 = vst.msk [vmem:[#allocation2 + $0x180] sm:$0xff] %vm313, 0.0
        %363 = vst.msk [vmem:[#allocation2 + $0x188] sm:$0xff] %vm313, 0.0
        %364 = vst.msk [vmem:[#allocation2 + $0x190] sm:$0xff] %vm313, 0.0
        %365 = vst.msk [vmem:[#allocation2 + $0x198] sm:$0xff] %vm313, 0.0
        %366 = vst.msk [vmem:[#allocation2 + $0x1a0] sm:$0xff] %vm313, 0.0
        %367 = vst.msk [vmem:[#allocation2 + $0x1a8] sm:$0xff] %vm313, 0.0
        %368 = vst.msk [vmem:[#allocation2 + $0x1b0] sm:$0xff] %vm313, 0.0
        %369 = vst.msk [vmem:[#allocation2 + $0x1b8] sm:$0xff] %vm313, 0.0
        %370 = vst.msk [vmem:[#allocation2 + $0x1c0] sm:$0xff] %vm313, 0.0
        %371 = vst.msk [vmem:[#allocation2 + $0x1c8] sm:$0xff] %vm313, 0.0
        %372 = vst.msk [vmem:[#allocation2 + $0x1d0] sm:$0xff] %vm313, 0.0
        %373 = vst.msk [vmem:[#allocation2 + $0x1d8] sm:$0xff] %vm313, 0.0
      $region40: #{matmul_affine.1} parent=35 // pred_fallthru
        _
      %v374 = vld [vmem:[#allocation2] sm:$0xff]
      %v375 = vld [vmem:[#allocation2 + $0x8] sm:$0xff]
      %v376 = vld [vmem:[#allocation2 + $0x10] sm:$0xff]
      %v377 = vld [vmem:[#allocation2 + $0x18] sm:$0xff]
      %v378 = vld [vmem:[#allocation2 + $0x20] sm:$0xff]
      %v379 = vld [vmem:[#allocation2 + $0x28] sm:$0xff]
      %v380 = vld [vmem:[#allocation2 + $0x30] sm:$0xff]
      %v381 = vld [vmem:[#allocation2 + $0x38] sm:$0xff]
      %v382 = vld [vmem:[#allocation2 + $0x40] sm:$0xff]
      %v383 = vld [vmem:[#allocation2 + $0x48] sm:$0xff]
      %v384 = vld [vmem:[#allocation2 + $0x50] sm:$0xff]
      %v385 = vld [vmem:[#allocation2 + $0x58] sm:$0xff]
      %v386 = vld [vmem:[#allocation2 + $0x60] sm:$0xff]
      %v387 = vld [vmem:[#allocation2 + $0x68] sm:$0xff]
      %v388 = vld [vmem:[#allocation2 + $0x70] sm:$0xff]
      %v389 = vld [vmem:[#allocation2 + $0x78] sm:$0xff]
      %v390 = vld [vmem:[#allocation2 + $0x80] sm:$0xff]
      %v391 = vld [vmem:[#allocation2 + $0x88] sm:$0xff]
      %v392 = vld [vmem:[#allocation2 + $0x90] sm:$0xff]
      %v393 = vld [vmem:[#allocation2 + $0x98] sm:$0xff]
      %v394 = vld [vmem:[#allocation2 + $0xa0] sm:$0xff]
      %v395 = vld [vmem:[#allocation2 + $0xa8] sm:$0xff]
      %v396 = vld [vmem:[#allocation2 + $0xb0] sm:$0xff]
      %v397 = vld [vmem:[#allocation2 + $0xb8] sm:$0xff]
      %v398 = vld [vmem:[#allocation2 + $0xc0] sm:$0xff]
      %v399 = vld [vmem:[#allocation2 + $0xc8] sm:$0xff]
      %v400 = vld [vmem:[#allocation2 + $0xd0] sm:$0xff]
      %v401 = vld [vmem:[#allocation2 + $0xd8] sm:$0xff]
      %v402 = vld [vmem:[#allocation2 + $0xe0] sm:$0xff]
      %v403 = vld [vmem:[#allocation2 + $0xe8] sm:$0xff]
      %v404 = vld [vmem:[#allocation2 + $0xf0] sm:$0xff]
      %v405 = vld [vmem:[#allocation2 + $0xf8] sm:$0xff]
      %v406 = vld [vmem:[#allocation2 + $0x100] sm:$0xff]
      %v407 = vld [vmem:[#allocation2 + $0x108] sm:$0xff]
      %v408 = vld [vmem:[#allocation2 + $0x110] sm:$0xff]
      %v409 = vld [vmem:[#allocation2 + $0x118] sm:$0xff]
      %v410 = vld [vmem:[#allocation2 + $0x120] sm:$0xff]
      %v411 = vld [vmem:[#allocation2 + $0x128] sm:$0xff]
      %v412 = vld [vmem:[#allocation2 + $0x130] sm:$0xff]
      %v413 = vld [vmem:[#allocation2 + $0x138] sm:$0xff]
      %v414 = vld [vmem:[#allocation2 + $0x140] sm:$0xff]
      %v415 = vld [vmem:[#allocation2 + $0x148] sm:$0xff]
      %v416 = vld [vmem:[#allocation2 + $0x150] sm:$0xff]
      %v417 = vld [vmem:[#allocation2 + $0x158] sm:$0xff]
      %v418 = vld [vmem:[#allocation2 + $0x160] sm:$0xff]
      %v419 = vld [vmem:[#allocation2 + $0x168] sm:$0xff]
      %v420 = vld [vmem:[#allocation2 + $0x170] sm:$0xff]
      %v421 = vld [vmem:[#allocation2 + $0x178] sm:$0xff]
      %v422 = vld [vmem:[#allocation2 + $0x180] sm:$0xff]
      %v423 = vld [vmem:[#allocation2 + $0x188] sm:$0xff]
      %v424 = vld [vmem:[#allocation2 + $0x190] sm:$0xff]
      %v425 = vld [vmem:[#allocation2 + $0x198] sm:$0xff]
      %v426 = vld [vmem:[#allocation2 + $0x1a0] sm:$0xff]
      %v427 = vld [vmem:[#allocation2 + $0x1a8] sm:$0xff]
      %v428 = vld [vmem:[#allocation2 + $0x1b0] sm:$0xff]
      %v429 = vld [vmem:[#allocation2 + $0x1b8] sm:$0xff]
      %v430 = vld [vmem:[#allocation2 + $0x1c0] sm:$0xff]
      %v431 = vld [vmem:[#allocation2 + $0x1c8] sm:$0xff]
      %v432 = vld [vmem:[#allocation2 + $0x1d0] sm:$0xff]
      %v433 = vld [vmem:[#allocation2 + $0x1d8] sm:$0xff]
      %v434 = vld [vmem:[%s281] sm:$0xff]
      %v435 = vld [vmem:[%s281 + $0x8] sm:$0xf]
      %v436 = vld [vmem:[%s281 + $0xc] sm:$0xff]
      %v437 = vld [vmem:[%s281 + $0x14] sm:$0xf]
      %v438 = vld [vmem:[%s281 + $0x18] sm:$0xff]
      %v439 = vld [vmem:[%s281 + $0x20] sm:$0xf]
      %v440 = vld [vmem:[%s281 + $0x24] sm:$0xff]
      %v441 = vld [vmem:[%s281 + $0x2c] sm:$0xf]
      %v442 = vld [vmem:[%s281 + $0x30] sm:$0xff]
      %v443 = vld [vmem:[%s281 + $0x38] sm:$0xf]
      %v444 = vld [vmem:[%s281 + $0x3c] sm:$0xff]
      %v445 = vld [vmem:[%s281 + $0x44] sm:$0xf]
      %v446 = vld [vmem:[%s281 + $0x48] sm:$0xff]
      %v447 = vld [vmem:[%s281 + $0x50] sm:$0xf]
      %v448 = vld [vmem:[%s281 + $0x54] sm:$0xff]
      %v449 = vld [vmem:[%s281 + $0x5c] sm:$0xf]
      %v450 = vld [vmem:[%s281 + $0x60] sm:$0xff]
      %v451 = vld [vmem:[%s281 + $0x68] sm:$0xf]
      %v452 = vld [vmem:[%s281 + $0x6c] sm:$0xff]
      %v453 = vld [vmem:[%s281 + $0x74] sm:$0xf]
      %v454 = vld [vmem:[%s281 + $0x78] sm:$0xff]
      %v455 = vld [vmem:[%s281 + $0x80] sm:$0xf]
      %v456 = vld [vmem:[%s281 + $0x84] sm:$0xff]
      %v457 = vld [vmem:[%s281 + $0x8c] sm:$0xf]
      %v458 = vld [vmem:[%s281 + $0x90] sm:$0xff]
      %v459 = vld [vmem:[%s281 + $0x98] sm:$0xf]
      %v460 = vld [vmem:[%s281 + $0x9c] sm:$0xff]
      %v461 = vld [vmem:[%s281 + $0xa4] sm:$0xf]
      %v462 = vld [vmem:[%s281 + $0xa8] sm:$0xff]
      %v463 = vld [vmem:[%s281 + $0xb0] sm:$0xf]
      %v464 = vld [vmem:[%s281 + $0xb4] sm:$0xff]
      %v465 = vld [vmem:[%s281 + $0xbc] sm:$0xf]
      %v466 = vld [vmem:[%s281 + $0xc0] sm:$0xff]
      %v467 = vld [vmem:[%s281 + $0xc8] sm:$0xf]
      %v468 = vld [vmem:[%s281 + $0xcc] sm:$0xff]
      %v469 = vld [vmem:[%s281 + $0xd4] sm:$0xf]
      %v470 = vld [vmem:[%s281 + $0xd8] sm:$0xff]
      %v471 = vld [vmem:[%s281 + $0xe0] sm:$0xf]
      %v472 = vld [vmem:[%s281 + $0xe4] sm:$0xff]
      %v473 = vld [vmem:[%s281 + $0xec] sm:$0xf]
      %v474 = vld [vmem:[%s281 + $0xf0] sm:$0xff]
      %v475 = vld [vmem:[%s281 + $0xf8] sm:$0xf]
      %v476 = vld [vmem:[%s281 + $0xfc] sm:$0xff]
      %v477 = vld [vmem:[%s281 + $0x104] sm:$0xf]
      %v478 = vld [vmem:[%s281 + $0x108] sm:$0xff]
      %v479 = vld [vmem:[%s281 + $0x110] sm:$0xf]
      %v480 = vld [vmem:[%s281 + $0x114] sm:$0xff]
      %v481 = vld [vmem:[%s281 + $0x11c] sm:$0xf]
      %v482 = vld [vmem:[%s281 + $0x120] sm:$0xff]
      %v483 = vld [vmem:[%s281 + $0x128] sm:$0xf]
      %v484 = vld [vmem:[%s281 + $0x12c] sm:$0xff]
      %v485 = vld [vmem:[%s281 + $0x134] sm:$0xf]
      %v486 = vld [vmem:[%s281 + $0x138] sm:$0xff]
      %v487 = vld [vmem:[%s281 + $0x140] sm:$0xf]
      %v488 = vld [vmem:[%s281 + $0x144] sm:$0xff]
      %v489 = vld [vmem:[%s281 + $0x14c] sm:$0xf]
      %v490 = vld [vmem:[%s281 + $0x150] sm:$0xff]
      %v491 = vld [vmem:[%s281 + $0x158] sm:$0xf]
      %v492 = vld [vmem:[%s281 + $0x15c] sm:$0xff]
      %v493 = vld [vmem:[%s281 + $0x164] sm:$0xf]
      %v494 = vld [vmem:[%s281 + $0x168] sm:$0xff]
      %v495 = vld [vmem:[%s281 + $0x170] sm:$0xf]
      %v496 = vld [vmem:[%s281 + $0x174] sm:$0xff]
      %v497 = vld [vmem:[%s281 + $0x17c] sm:$0xf]
      %v498 = vld [vmem:[%s281 + $0x180] sm:$0xff]
      %v499 = vld [vmem:[%s281 + $0x188] sm:$0xf]
      %v500 = vld [vmem:[%s281 + $0x18c] sm:$0xff]
      %v501 = vld [vmem:[%s281 + $0x194] sm:$0xf]
      %v502 = vld [vmem:[%s281 + $0x198] sm:$0xff]
      %v503 = vld [vmem:[%s281 + $0x1a0] sm:$0xf]
      %v504 = vld [vmem:[%s281 + $0x1a4] sm:$0xff]
      %v505 = vld [vmem:[%s281 + $0x1ac] sm:$0xf]
      %v506 = vld [vmem:[%s281 + $0x1b0] sm:$0xff]
      %v507 = vld [vmem:[%s281 + $0x1b8] sm:$0xf]
      %v508 = vld [vmem:[%s281 + $0x1bc] sm:$0xff]
      %v509 = vld [vmem:[%s281 + $0x1c4] sm:$0xf]
      %v510 = vld [vmem:[%s281 + $0x1c8] sm:$0xff]
      %v511 = vld [vmem:[%s281 + $0x1d0] sm:$0xf]
      %v512 = vld [vmem:[%s281 + $0x1d4] sm:$0xff]
      %v513 = vld [vmem:[%s281 + $0x1dc] sm:$0xf]
      %v514 = vld [vmem:[%s281 + $0x1e0] sm:$0xff]
      %v515 = vld [vmem:[%s281 + $0x1e8] sm:$0xf]
      %v516 = vld [vmem:[%s281 + $0x1ec] sm:$0xff]
      %v517 = vld [vmem:[%s281 + $0x1f4] sm:$0xf]
      %v518 = vld [vmem:[%s281 + $0x1f8] sm:$0xff]
      %v519 = vld [vmem:[%s281 + $0x200] sm:$0xf]
      %v520 = vld [vmem:[%s281 + $0x204] sm:$0xff]
      %v521 = vld [vmem:[%s281 + $0x20c] sm:$0xf]
      %v522 = vld [vmem:[%s281 + $0x210] sm:$0xff]
      %v523 = vld [vmem:[%s281 + $0x218] sm:$0xf]
      %v524 = vld [vmem:[%s281 + $0x21c] sm:$0xff]
      %v525 = vld [vmem:[%s281 + $0x224] sm:$0xf]
      %v526 = vld [vmem:[%s281 + $0x228] sm:$0xff]
      %v527 = vld [vmem:[%s281 + $0x230] sm:$0xf]
      %v528 = vld [vmem:[%s281 + $0x234] sm:$0xff]
      %v529 = vld [vmem:[%s281 + $0x23c] sm:$0xf]
      %v530 = vld [vmem:[%s281 + $0x240] sm:$0xff]
      %v531 = vld [vmem:[%s281 + $0x248] sm:$0xf]
      %v532 = vld [vmem:[%s281 + $0x24c] sm:$0xff]
      %v533 = vld [vmem:[%s281 + $0x254] sm:$0xf]
      %v534 = vld [vmem:[%s281 + $0x258] sm:$0xff]
      %v535 = vld [vmem:[%s281 + $0x260] sm:$0xf]
      %v536 = vld [vmem:[%s281 + $0x264] sm:$0xff]
      %v537 = vld [vmem:[%s281 + $0x26c] sm:$0xf]
      %v538 = vld [vmem:[%s281 + $0x270] sm:$0xff]
      %v539 = vld [vmem:[%s281 + $0x278] sm:$0xf]
      %v540 = vld [vmem:[%s281 + $0x27c] sm:$0xff]
      %v541 = vld [vmem:[%s281 + $0x284] sm:$0xf]
      %v542 = vld [vmem:[%s281 + $0x288] sm:$0xff]
      %v543 = vld [vmem:[%s281 + $0x290] sm:$0xf]
      %v544 = vld [vmem:[%s281 + $0x294] sm:$0xff]
      %v545 = vld [vmem:[%s281 + $0x29c] sm:$0xf]
      %v546 = vld [vmem:[%s281 + $0x2a0] sm:$0xff]
      %v547 = vld [vmem:[%s281 + $0x2a8] sm:$0xf]
      %v548 = vld [vmem:[%s281 + $0x2ac] sm:$0xff]
      %v549 = vld [vmem:[%s281 + $0x2b4] sm:$0xf]
      %v550 = vld [vmem:[%s281 + $0x2b8] sm:$0xff]
      %v551 = vld [vmem:[%s281 + $0x2c0] sm:$0xf]
      %v552 = vld [vmem:[%s281 + $0x2c4] sm:$0xff]
      %v553 = vld [vmem:[%s281 + $0x2cc] sm:$0xf]
      %v554 = vld [vmem:[%s291] sm:$0xf]
      %v555 = vld [vmem:[%s291 + $0x4] sm:$0xf]
      %v556 = vld [vmem:[%s291 + $0x8] sm:$0xf]
      %v557 = vld [vmem:[%s291 + $0xc] sm:$0xf]
      %v558 = vld [vmem:[%s291 + $0x10] sm:$0xf]
      %v559 = vld [vmem:[%s291 + $0x14] sm:$0xf]
      %v560 = vld [vmem:[%s291 + $0x18] sm:$0xf]
      %v561 = vld [vmem:[%s291 + $0x1c] sm:$0xf]
      %v562 = vld [vmem:[%s291 + $0x20] sm:$0xf]
      %v563 = vld [vmem:[%s291 + $0x24] sm:$0xf]
      %v564 = vld [vmem:[%s291 + $0x28] sm:$0xf]
      %v565 = vld [vmem:[%s291 + $0x2c] sm:$0xf]
      %v566 = vld [vmem:[%s291 + $0x30] sm:$0xf]
      %v567 = vld [vmem:[%s291 + $0x34] sm:$0xf]
      %v568 = vld [vmem:[%s291 + $0x38] sm:$0xf]
      %v569 = vld [vmem:[%s291 + $0x3c] sm:$0xf]
      %v570 = vld [vmem:[%s291 + $0x40] sm:$0xf]
      %v571 = vld [vmem:[%s291 + $0x44] sm:$0xf]
      %v572 = vld [vmem:[%s291 + $0x48] sm:$0xf]
      %v573 = vld [vmem:[%s291 + $0x4c] sm:$0xf]
      %v574 = vld [vmem:[%s291 + $0x50] sm:$0xf]
      %v575 = vld [vmem:[%s291 + $0x54] sm:$0xf]
      %v576 = vld [vmem:[%s291 + $0x58] sm:$0xf]
      %v577 = vld [vmem:[%s291 + $0x5c] sm:$0xf]
      %v578 = vld [vmem:[%s291 + $0x60] sm:$0xf]
      %v579 = vld [vmem:[%s291 + $0x64] sm:$0xf]
      %v580 = vld [vmem:[%s291 + $0x68] sm:$0xf]
      %v581 = vld [vmem:[%s291 + $0x6c] sm:$0xf]
      %v582 = vld [vmem:[%s291 + $0x70] sm:$0xf]
      %v583 = vld [vmem:[%s291 + $0x74] sm:$0xf]
      %v584 = vld [vmem:[%s291 + $0x78] sm:$0xf]
      %v585 = vld [vmem:[%s291 + $0x7c] sm:$0xf]
      %v586 = vld [vmem:[%s291 + $0x80] sm:$0xf]
      %v587 = vld [vmem:[%s291 + $0x84] sm:$0xf]
      %v588 = vld [vmem:[%s291 + $0x88] sm:$0xf]
      %v589 = vld [vmem:[%s291 + $0x8c] sm:$0xf]
      %v590 = vld [vmem:[%s291 + $0x90] sm:$0x7]
      %v711 = vunpack.c.l.b16 %v434
      %v712 = vunpack.c.h.b16 %v434
      %v713 = vunpack.c.l.b16 %v435
      %v714 = vunpack.c.l.b16 %v436
      %v715 = vunpack.c.h.b16 %v436
      %v716 = vunpack.c.l.b16 %v437
      %v717 = vunpack.c.l.b16 %v438
      %v718 = vunpack.c.h.b16 %v438
      %v719 = vunpack.c.l.b16 %v439
      %v720 = vunpack.c.l.b16 %v440
      %v721 = vunpack.c.h.b16 %v440
      %v722 = vunpack.c.l.b16 %v441
      %v723 = vunpack.c.l.b16 %v442
      %v724 = vunpack.c.h.b16 %v442
      %v725 = vunpack.c.l.b16 %v443
      %v726 = vunpack.c.l.b16 %v444
      %v727 = vunpack.c.h.b16 %v444
      %v728 = vunpack.c.l.b16 %v445
      %v729 = vunpack.c.l.b16 %v446
      %v730 = vunpack.c.h.b16 %v446
      %v731 = vunpack.c.l.b16 %v447
      %v732 = vunpack.c.l.b16 %v448
      %v733 = vunpack.c.h.b16 %v448
      %v734 = vunpack.c.l.b16 %v449
      %v735 = vunpack.c.l.b16 %v450
      %v736 = vunpack.c.h.b16 %v450
      %v737 = vunpack.c.l.b16 %v451
      %v738 = vunpack.c.l.b16 %v452
      %v739 = vunpack.c.h.b16 %v452
      %v740 = vunpack.c.l.b16 %v453
      %v741 = vunpack.c.l.b16 %v454
      %v742 = vunpack.c.h.b16 %v454
      %v743 = vunpack.c.l.b16 %v455
      %v744 = vunpack.c.l.b16 %v456
      %v745 = vunpack.c.h.b16 %v456
      %v746 = vunpack.c.l.b16 %v457
      %v747 = vunpack.c.l.b16 %v458
      %v748 = vunpack.c.h.b16 %v458
      %v749 = vunpack.c.l.b16 %v459
      %v750 = vunpack.c.l.b16 %v460
      %v751 = vunpack.c.h.b16 %v460
      %v752 = vunpack.c.l.b16 %v461
      %v753 = vunpack.c.l.b16 %v462
      %v754 = vunpack.c.h.b16 %v462
      %v755 = vunpack.c.l.b16 %v463
      %v756 = vunpack.c.l.b16 %v464
      %v757 = vunpack.c.h.b16 %v464
      %v758 = vunpack.c.l.b16 %v465
      %v759 = vunpack.c.l.b16 %v466
      %v760 = vunpack.c.h.b16 %v466
      %v761 = vunpack.c.l.b16 %v467
      %v762 = vunpack.c.l.b16 %v468
      %v763 = vunpack.c.h.b16 %v468
      %v764 = vunpack.c.l.b16 %v469
      %v765 = vunpack.c.l.b16 %v470
      %v766 = vunpack.c.h.b16 %v470
      %v767 = vunpack.c.l.b16 %v471
      %v768 = vunpack.c.l.b16 %v472
      %v769 = vunpack.c.h.b16 %v472
      %v770 = vunpack.c.l.b16 %v473
      %v771 = vunpack.c.l.b16 %v474
      %v772 = vunpack.c.h.b16 %v474
      %v773 = vunpack.c.l.b16 %v475
      %v774 = vunpack.c.l.b16 %v476
      %v775 = vunpack.c.h.b16 %v476
      %v776 = vunpack.c.l.b16 %v477
      %v777 = vunpack.c.l.b16 %v478
      %v778 = vunpack.c.h.b16 %v478
      %v779 = vunpack.c.l.b16 %v479
      %v780 = vunpack.c.l.b16 %v480
      %v781 = vunpack.c.h.b16 %v480
      %v782 = vunpack.c.l.b16 %v481
      %v783 = vunpack.c.l.b16 %v482
      %v784 = vunpack.c.h.b16 %v482
      %v785 = vunpack.c.l.b16 %v483
      %v786 = vunpack.c.l.b16 %v484
      %v787 = vunpack.c.h.b16 %v484
      %v788 = vunpack.c.l.b16 %v485
      %v789 = vunpack.c.l.b16 %v486
      %v790 = vunpack.c.h.b16 %v486
      %v791 = vunpack.c.l.b16 %v487
      %v792 = vunpack.c.l.b16 %v488
      %v793 = vunpack.c.h.b16 %v488
      %v794 = vunpack.c.l.b16 %v489
      %v795 = vunpack.c.l.b16 %v490
      %v796 = vunpack.c.h.b16 %v490
      %v797 = vunpack.c.l.b16 %v491
      %v798 = vunpack.c.l.b16 %v492
      %v799 = vunpack.c.h.b16 %v492
      %v800 = vunpack.c.l.b16 %v493
      %v801 = vunpack.c.l.b16 %v494
      %v802 = vunpack.c.h.b16 %v494
      %v803 = vunpack.c.l.b16 %v495
      %v804 = vunpack.c.l.b16 %v496
      %v805 = vunpack.c.h.b16 %v496
      %v806 = vunpack.c.l.b16 %v497
      %v807 = vunpack.c.l.b16 %v498
      %v808 = vunpack.c.h.b16 %v498
      %v809 = vunpack.c.l.b16 %v499
      %v810 = vunpack.c.l.b16 %v500
      %v811 = vunpack.c.h.b16 %v500
      %v812 = vunpack.c.l.b16 %v501
      %v813 = vunpack.c.l.b16 %v502
      %v814 = vunpack.c.h.b16 %v502
      %v815 = vunpack.c.l.b16 %v503
      %v816 = vunpack.c.l.b16 %v504
      %v817 = vunpack.c.h.b16 %v504
      %v818 = vunpack.c.l.b16 %v505
      %v819 = vunpack.c.l.b16 %v506
      %v820 = vunpack.c.h.b16 %v506
      %v821 = vunpack.c.l.b16 %v507
      %v822 = vunpack.c.l.b16 %v508
      %v823 = vunpack.c.h.b16 %v508
      %v824 = vunpack.c.l.b16 %v509
      %v825 = vunpack.c.l.b16 %v510
      %v826 = vunpack.c.h.b16 %v510
      %v827 = vunpack.c.l.b16 %v511
      %v828 = vunpack.c.l.b16 %v512
      %v829 = vunpack.c.h.b16 %v512
      %v830 = vunpack.c.l.b16 %v513
      %v831 = vunpack.c.l.b16 %v514
      %v832 = vunpack.c.h.b16 %v514
      %v833 = vunpack.c.l.b16 %v515
      %v834 = vunpack.c.l.b16 %v516
      %v835 = vunpack.c.h.b16 %v516
      %v836 = vunpack.c.l.b16 %v517
      %v837 = vunpack.c.l.b16 %v518
      %v838 = vunpack.c.h.b16 %v518
      %v839 = vunpack.c.l.b16 %v519
      %v840 = vunpack.c.l.b16 %v520
      %v841 = vunpack.c.h.b16 %v520
      %v842 = vunpack.c.l.b16 %v521
      %v843 = vunpack.c.l.b16 %v522
      %v844 = vunpack.c.h.b16 %v522
      %v845 = vunpack.c.l.b16 %v523
      %v846 = vunpack.c.l.b16 %v524
      %v847 = vunpack.c.h.b16 %v524
      %v848 = vunpack.c.l.b16 %v525
      %v849 = vunpack.c.l.b16 %v526
      %v850 = vunpack.c.h.b16 %v526
      %v851 = vunpack.c.l.b16 %v527
      %v852 = vunpack.c.l.b16 %v528
      %v853 = vunpack.c.h.b16 %v528
      %v854 = vunpack.c.l.b16 %v529
      %v855 = vunpack.c.l.b16 %v530
      %v856 = vunpack.c.h.b16 %v530
      %v857 = vunpack.c.l.b16 %v531
      %v858 = vunpack.c.l.b16 %v532
      %v859 = vunpack.c.h.b16 %v532
      %v860 = vunpack.c.l.b16 %v533
      %v861 = vunpack.c.l.b16 %v534
      %v862 = vunpack.c.h.b16 %v534
      %v863 = vunpack.c.l.b16 %v535
      %v864 = vunpack.c.l.b16 %v536
      %v865 = vunpack.c.h.b16 %v536
      %v866 = vunpack.c.l.b16 %v537
      %v867 = vunpack.c.l.b16 %v538
      %v868 = vunpack.c.h.b16 %v538
      %v869 = vunpack.c.l.b16 %v539
      %v870 = vunpack.c.l.b16 %v540
      %v871 = vunpack.c.h.b16 %v540
      %v872 = vunpack.c.l.b16 %v541
      %v873 = vunpack.c.l.b16 %v542
      %v874 = vunpack.c.h.b16 %v542
      %v875 = vunpack.c.l.b16 %v543
      %v876 = vunpack.c.l.b16 %v544
      %v877 = vunpack.c.h.b16 %v544
      %v878 = vunpack.c.l.b16 %v545
      %v879 = vunpack.c.l.b16 %v546
      %v880 = vunpack.c.h.b16 %v546
      %v881 = vunpack.c.l.b16 %v547
      %v882 = vunpack.c.l.b16 %v548
      %v883 = vunpack.c.h.b16 %v548
      %v884 = vunpack.c.l.b16 %v549
      %v885 = vunpack.c.l.b16 %v550
      %v886 = vunpack.c.h.b16 %v550
      %v887 = vunpack.c.l.b16 %v551
      %v888 = vunpack.c.l.b16 %v552
      %v889 = vunpack.c.h.b16 %v552
      %v890 = vunpack.c.l.b16 %v553
      %v891 = vpack.c.b16 %v714, %v711
      %v892 = vpack.c.b16 %v715, %v712
      %v893 = vpack.c.b16 %v716, %v713
      %v894 = vpack.c.b16 %v720, %v717
      %v895 = vpack.c.b16 %v721, %v718
      %v896 = vpack.c.b16 %v722, %v719
      %v897 = vpack.c.b16 %v726, %v723
      %v898 = vpack.c.b16 %v727, %v724
      %v899 = vpack.c.b16 %v728, %v725
      %v900 = vpack.c.b16 %v732, %v729
      %v901 = vpack.c.b16 %v733, %v730
      %v902 = vpack.c.b16 %v734, %v731
      %v903 = vpack.c.b16 %v738, %v735
      %v904 = vpack.c.b16 %v739, %v736
      %v905 = vpack.c.b16 %v740, %v737
      %v906 = vpack.c.b16 %v744, %v741
      %v907 = vpack.c.b16 %v745, %v742
      %v908 = vpack.c.b16 %v746, %v743
      %v909 = vpack.c.b16 %v750, %v747
      %v910 = vpack.c.b16 %v751, %v748
      %v911 = vpack.c.b16 %v752, %v749
      %v912 = vpack.c.b16 %v756, %v753
      %v913 = vpack.c.b16 %v757, %v754
      %v914 = vpack.c.b16 %v758, %v755
      %v915 = vpack.c.b16 %v762, %v759
      %v916 = vpack.c.b16 %v763, %v760
      %v917 = vpack.c.b16 %v764, %v761
      %v918 = vpack.c.b16 %v768, %v765
      %v919 = vpack.c.b16 %v769, %v766
      %v920 = vpack.c.b16 %v770, %v767
      %v921 = vpack.c.b16 %v774, %v771
      %v922 = vpack.c.b16 %v775, %v772
      %v923 = vpack.c.b16 %v776, %v773
      %v924 = vpack.c.b16 %v780, %v777
      %v925 = vpack.c.b16 %v781, %v778
      %v926 = vpack.c.b16 %v782, %v779
      %v927 = vpack.c.b16 %v786, %v783
      %v928 = vpack.c.b16 %v787, %v784
      %v929 = vpack.c.b16 %v788, %v785
      %v930 = vpack.c.b16 %v792, %v789
      %v931 = vpack.c.b16 %v793, %v790
      %v932 = vpack.c.b16 %v794, %v791
      %v933 = vpack.c.b16 %v798, %v795
      %v934 = vpack.c.b16 %v799, %v796
      %v935 = vpack.c.b16 %v800, %v797
      %v936 = vpack.c.b16 %v804, %v801
      %v937 = vpack.c.b16 %v805, %v802
      %v938 = vpack.c.b16 %v806, %v803
      %v939 = vpack.c.b16 %v810, %v807
      %v940 = vpack.c.b16 %v811, %v808
      %v941 = vpack.c.b16 %v812, %v809
      %v942 = vpack.c.b16 %v816, %v813
      %v943 = vpack.c.b16 %v817, %v814
      %v944 = vpack.c.b16 %v818, %v815
      %v945 = vpack.c.b16 %v822, %v819
      %v946 = vpack.c.b16 %v823, %v820
      %v947 = vpack.c.b16 %v824, %v821
      %v948 = vpack.c.b16 %v828, %v825
      %v949 = vpack.c.b16 %v829, %v826
      %v950 = vpack.c.b16 %v830, %v827
      %v951 = vpack.c.b16 %v834, %v831
      %v952 = vpack.c.b16 %v835, %v832
      %v953 = vpack.c.b16 %v836, %v833
      %v954 = vpack.c.b16 %v840, %v837
      %v955 = vpack.c.b16 %v841, %v838
      %v956 = vpack.c.b16 %v842, %v839
      %v957 = vpack.c.b16 %v846, %v843
      %v958 = vpack.c.b16 %v847, %v844
      %v959 = vpack.c.b16 %v848, %v845
      %v960 = vpack.c.b16 %v852, %v849
      %v961 = vpack.c.b16 %v853, %v850
      %v962 = vpack.c.b16 %v854, %v851
      %v963 = vpack.c.b16 %v858, %v855
      %v964 = vpack.c.b16 %v859, %v856
      %v965 = vpack.c.b16 %v860, %v857
      %v966 = vpack.c.b16 %v864, %v861
      %v967 = vpack.c.b16 %v865, %v862
      %v968 = vpack.c.b16 %v866, %v863
      %v969 = vpack.c.b16 %v870, %v867
      %v970 = vpack.c.b16 %v871, %v868
      %v971 = vpack.c.b16 %v872, %v869
      %v972 = vpack.c.b16 %v876, %v873
      %v973 = vpack.c.b16 %v877, %v874
      %v974 = vpack.c.b16 %v878, %v875
      %v975 = vpack.c.b16 %v882, %v879
      %v976 = vpack.c.b16 %v883, %v880
      %v977 = vpack.c.b16 %v884, %v881
      %v978 = vpack.c.b16 %v888, %v885
      %v979 = vpack.c.b16 %v889, %v886
      %v980 = vpack.c.b16 %v890, %v887
      %v1078 = vunpack.c.l.b16 %v554
      %v1079 = vunpack.c.l.b16 %v555
      %v1080 = vunpack.c.l.b16 %v556
      %v1081 = vunpack.c.l.b16 %v557
      %v1082 = vunpack.c.l.b16 %v558
      %v1083 = vunpack.c.l.b16 %v559
      %v1084 = vunpack.c.l.b16 %v560
      %v1085 = vunpack.c.l.b16 %v561
      %v1086 = vunpack.c.l.b16 %v562
      %v1087 = vunpack.c.l.b16 %v563
      %v1088 = vunpack.c.l.b16 %v564
      %v1089 = vunpack.c.l.b16 %v565
      %v1090 = vunpack.c.l.b16 %v566
      %v1091 = vunpack.c.l.b16 %v567
      %v1092 = vunpack.c.l.b16 %v568
      %v1093 = vunpack.c.l.b16 %v569
      %v1094 = vunpack.c.l.b16 %v570
      %v1095 = vunpack.c.l.b16 %v571
      %v1096 = vunpack.c.l.b16 %v572
      %v1097 = vunpack.c.l.b16 %v573
      %v1098 = vunpack.c.l.b16 %v574
      %v1099 = vunpack.c.l.b16 %v575
      %v1100 = vunpack.c.l.b16 %v576
      %v1101 = vunpack.c.l.b16 %v577
      %v1102 = vunpack.c.l.b16 %v578
      %v1103 = vunpack.c.l.b16 %v579
      %v1104 = vunpack.c.l.b16 %v580
      %v1105 = vunpack.c.l.b16 %v581
      %v1106 = vunpack.c.l.b16 %v582
      %v1107 = vunpack.c.l.b16 %v583
      %v1108 = vunpack.c.l.b16 %v584
      %v1109 = vunpack.c.l.b16 %v585
      %v1110 = vunpack.c.l.b16 %v586
      %v1111 = vunpack.c.l.b16 %v587
      %v1112 = vunpack.c.l.b16 %v588
      %v1113 = vunpack.c.l.b16 %v589
      %v1114 = vunpack.c.l.b16 %v590
      %v1115 = vpack.c.b16 %v1079, %v1078
      %v1116 = vpack.c.b16 %v1081, %v1080
      %v1117 = vpack.c.b16 %v1083, %v1082
      %v1118 = vpack.c.b16 %v1085, %v1084
      %v1119 = vpack.c.b16 %v1087, %v1086
      %v1120 = vpack.c.b16 %v1089, %v1088
      %v1121 = vpack.c.b16 %v1091, %v1090
      %v1122 = vpack.c.b16 %v1093, %v1092
      %v1123 = vpack.c.b16 %v1095, %v1094
      %v1124 = vpack.c.b16 %v1097, %v1096
      %v1125 = vpack.c.b16 %v1099, %v1098
      %v1126 = vpack.c.b16 %v1101, %v1100
      %v1127 = vpack.c.b16 %v1103, %v1102
      %v1128 = vpack.c.b16 %v1105, %v1104
      %v1129 = vpack.c.b16 %v1107, %v1106
      %v1130 = vpack.c.b16 %v1109, %v1108
      %v1131 = vpack.c.b16 %v1111, %v1110
      %v1132 = vpack.c.b16 %v1113, %v1112
      %v1133 = vpack.c.b16 %v1114, %v1114
      %vm1152 = vcmask 310272
      %v1154 = vsel %vm1152, %v893, 0
      %v1157 = vsel %vm1152, %v896, 0
      %v1160 = vsel %vm1152, %v899, 0
      %v1163 = vsel %vm1152, %v902, 0
      %v1166 = vsel %vm1152, %v905, 0
      %v1169 = vsel %vm1152, %v908, 0
      %v1172 = vsel %vm1152, %v911, 0
      %v1175 = vsel %vm1152, %v914, 0
      %v1178 = vsel %vm1152, %v917, 0
      %v1181 = vsel %vm1152, %v920, 0
      %v1184 = vsel %vm1152, %v923, 0
      %v1187 = vsel %vm1152, %v926, 0
      %v1190 = vsel %vm1152, %v929, 0
      %v1193 = vsel %vm1152, %v932, 0
      %v1196 = vsel %vm1152, %v935, 0
      %v1199 = vsel %vm1152, %v938, 0
      %v1202 = vsel %vm1152, %v941, 0
      %v1205 = vsel %vm1152, %v944, 0
      %v1208 = vsel %vm1152, %v947, 0
      %v1211 = vsel %vm1152, %v950, 0
      %v1214 = vsel %vm1152, %v953, 0
      %v1217 = vsel %vm1152, %v956, 0
      %v1220 = vsel %vm1152, %v959, 0
      %v1223 = vsel %vm1152, %v962, 0
      %v1226 = vsel %vm1152, %v965, 0
      %v1229 = vsel %vm1152, %v968, 0
      %v1232 = vsel %vm1152, %v971, 0
      %v1235 = vsel %vm1152, %v974, 0
      %v1238 = vsel %vm1152, %v977, 0
      %v1241 = vsel %vm1152, %v980, 0
      %vm1243 = vcmask 1042432
      %v1245 = vsel %vm1243, %v1133, 0
      %1247 = vmatprep.subr.bf16.mxu0 0
      %1248 = vmatpush1.bf16.msra.mxu0 %v1115
      %1249 = vmatprep.subr.bf16.mxu0 0
      %1250 = vmatpush1.bf16.msra.mxu0 %v1116
      %1251 = vmatprep.subr.bf16.mxu0 0
      %1252 = vmatpush1.bf16.msra.mxu0 %v1117
      %1253 = vmatprep.subr.bf16.mxu0 0
      %1254 = vmatpush1.bf16.msra.mxu0 %v1118
      %1255 = vmatprep.subr.bf16.mxu0 0
      %1256 = vmatpush1.bf16.msra.mxu0 %v1119
      %1257 = vmatprep.subr.bf16.mxu0 0
      %1258 = vmatpush1.bf16.msra.mxu0 %v1120
      %1259 = vmatprep.subr.bf16.mxu0 0
      %1260 = vmatpush1.bf16.msra.mxu0 %v1121
      %1261 = vmatprep.subr.bf16.mxu0 0
      %1262 = vmatpush1.bf16.msra.mxu0 %v1122
      %1263 = vmatprep.subr.bf16.mxu0 0
      %1264 = vmatpush1.bf16.msra.mxu0 %v1123
      %1265 = vmatprep.subr.bf16.mxu0 0
      %1266 = vmatpush1.bf16.msra.mxu0 %v1124
      %1267 = vmatprep.subr.bf16.mxu0 0
      %1268 = vmatpush1.bf16.msra.mxu0 %v1125
      %1269 = vmatprep.subr.bf16.mxu0 0
      %1270 = vmatpush1.bf16.msra.mxu0 %v1126
      %1271 = vmatprep.subr.bf16.mxu0 0
      %1272 = vmatpush1.bf16.msra.mxu0 %v1127
      %1273 = vmatprep.subr.bf16.mxu0 0
      %1274 = vmatpush1.bf16.msra.mxu0 %v1128
      %1275 = vmatprep.subr.bf16.mxu0 0
      %1276 = vmatpush1.bf16.msra.mxu0 %v1129
      %1277 = vmatprep.subr.bf16.mxu0 0
      %1278 = vmatpush1.bf16.msra.mxu0 %v1130
      %1279 = vmatprep.mubr.bf16.mxu0 %v892
      %1280 = vmatmul.mubr.bf16.gmra.mrb[0].mxu0 %v891
      %v1281 = vpop.f32.mrb[0].mxu0
      %v1282 = vadd.f32 0.0, %v1281
      %v1283 = vpop.f32.mrb[0].mxu0
      %v1284 = vpop.f32.mrb[0].mxu0
      %v1285 = vadd.f32 0.0, %v1284
      %v1286 = vpop.f32.mrb[0].mxu0
      %1287 = vmatprep.mubr.bf16.mxu0 %v895
      %1288 = vmatmul.mubr.bf16.gmra.mrb[0].mxu0 %v894
      %v1289 = vpop.f32.mrb[0].mxu0
      %v1290 = vadd.f32 0.0, %v1289
      %v1291 = vpop.f32.mrb[0].mxu0
      %v1292 = vpop.f32.mrb[0].mxu0
      %v1293 = vadd.f32 0.0, %v1292
      %v1294 = vpop.f32.mrb[0].mxu0
      %1295 = vmatprep.mubr.bf16.mxu0 %v898
      %1296 = vmatmul.mubr.bf16.gmra.mrb[0].mxu0 %v897
      %v1297 = vpop.f32.mrb[0].mxu0
      %v1298 = vadd.f32 0.0, %v1297
      %v1299 = vpop.f32.mrb[0].mxu0
      %v1300 = vpop.f32.mrb[0].mxu0
      %v1301 = vadd.f32 0.0, %v1300
      %v1302 = vpop.f32.mrb[0].mxu0
      %1303 = vmatprep.mubr.bf16.mxu0 %v901
      %1304 = vmatmul.mubr.bf16.gmra.mrb[0].mxu0 %v900
      %v1305 = vpop.f32.mrb[0].mxu0
      %v1306 = vadd.f32 0.0, %v1305
      %v1307 = vpop.f32.mrb[0].mxu0
      %v1308 = vpop.f32.mrb[0].mxu0
      %v1309 = vadd.f32 0.0, %v1308
      %v1310 = vpop.f32.mrb[0].mxu0
      %1311 = vmatprep.mubr.bf16.mxu0 %v904
      %1312 = vmatmul.mubr.bf16.gmra.mrb[0].mxu0 %v903
      %v1313 = vpop.f32.mrb[0].mxu0
      %v1314 = vadd.f32 0.0, %v1313
      %v1315 = vpop.f32.mrb[0].mxu0
      %v1316 = vpop.f32.mrb[0].mxu0
      %v1317 = vadd.f32 0.0, %v1316
      %v1318 = vpop.f32.mrb[0].mxu0
      %1319 = vmatprep.mubr.bf16.mxu0 %v907
      %1320 = vmatmul.mubr.bf16.gmra.mrb[0].mxu0 %v906
      %v1321 = vpop.f32.mrb[0].mxu0
      %v1322 = vadd.f32 0.0, %v1321
      %v1323 = vpop.f32.mrb[0].mxu0
      %v1324 = vpop.f32.mrb[0].mxu0
      %v1325 = vadd.f32 0.0, %v1324
      %v1326 = vpop.f32.mrb[0].mxu0
      %1327 = vmatprep.mubr.bf16.mxu0 %v910
      %1328 = vmatmul.mubr.bf16.gmra.mrb[0].mxu0 %v909
      %v1329 = vpop.f32.mrb[0].mxu0
      %v1330 = vadd.f32 0.0, %v1329
      %v1331 = vpop.f32.mrb[0].mxu0
      %v1332 = vpop.f32.mrb[0].mxu0
      %v1333 = vadd.f32 0.0, %v1332
      %v1334 = vpop.f32.mrb[0].mxu0
      %1335 = vmatprep.mubr.bf16.mxu0 %v913
      %1336 = vmatmul.mubr.bf16.gmra.mrb[0].mxu0 %v912
      %v1337 = vpop.f32.mrb[0].mxu0
      %v1338 = vadd.f32 0.0, %v1337
      %v1339 = vpop.f32.mrb[0].mxu0
      %v1340 = vpop.f32.mrb[0].mxu0
      %v1341 = vadd.f32 0.0, %v1340
      %v1342 = vpop.f32.mrb[0].mxu0
      %1343 = vmatprep.mubr.bf16.mxu0 %v916
      %1344 = vmatmul.mubr.bf16.gmra.mrb[0].mxu0 %v915
      %v1345 = vpop.f32.mrb[0].mxu0
      %v1346 = vadd.f32 0.0, %v1345
      %v1347 = vpop.f32.mrb[0].mxu0
      %v1348 = vpop.f32.mrb[0].mxu0
      %v1349 = vadd.f32 0.0, %v1348
      %v1350 = vpop.f32.mrb[0].mxu0
      %1351 = vmatprep.mubr.bf16.mxu0 %v919
      %1352 = vmatmul.mubr.bf16.gmra.mrb[0].mxu0 %v918
      %v1353 = vpop.f32.mrb[0].mxu0
      %v1354 = vadd.f32 0.0, %v1353
      %v1355 = vpop.f32.mrb[0].mxu0
      %v1356 = vpop.f32.mrb[0].mxu0
      %v1357 = vadd.f32 0.0, %v1356
      %v1358 = vpop.f32.mrb[0].mxu0
      %1359 = vmatprep.mubr.bf16.mxu0 %v922
      %1360 = vmatmul.mubr.bf16.gmra.mrb[0].mxu0 %v921
      %v1361 = vpop.f32.mrb[0].mxu0
      %v1362 = vadd.f32 0.0, %v1361
      %v1363 = vpop.f32.mrb[0].mxu0
      %v1364 = vpop.f32.mrb[0].mxu0
      %v1365 = vadd.f32 0.0, %v1364
      %v1366 = vpop.f32.mrb[0].mxu0
      %1367 = vmatprep.mubr.bf16.mxu0 %v925
      %1368 = vmatmul.mubr.bf16.gmra.mrb[0].mxu0 %v924
      %v1369 = vpop.f32.mrb[0].mxu0
      %v1370 = vadd.f32 0.0, %v1369
      %v1371 = vpop.f32.mrb[0].mxu0
      %v1372 = vpop.f32.mrb[0].mxu0
      %v1373 = vadd.f32 0.0, %v1372
      %v1374 = vpop.f32.mrb[0].mxu0
      %1375 = vmatprep.mubr.bf16.mxu0 %v928
      %1376 = vmatmul.mubr.bf16.gmra.mrb[0].mxu0 %v927
      %v1377 = vpop.f32.mrb[0].mxu0
      %v1378 = vadd.f32 0.0, %v1377
      %v1379 = vpop.f32.mrb[0].mxu0
      %v1380 = vpop.f32.mrb[0].mxu0
      %v1381 = vadd.f32 0.0, %v1380
      %v1382 = vpop.f32.mrb[0].mxu0
      %1383 = vmatprep.mubr.bf16.mxu0 %v931
      %1384 = vmatmul.mubr.bf16.gmra.mrb[0].mxu0 %v930
      %v1385 = vpop.f32.mrb[0].mxu0
      %v1386 = vadd.f32 0.0, %v1385
      %v1387 = vpop.f32.mrb[0].mxu0
      %v1388 = vpop.f32.mrb[0].mxu0
      %v1389 = vadd.f32 0.0, %v1388
      %v1390 = vpop.f32.mrb[0].mxu0
      %1391 = vmatprep.mubr.bf16.mxu0 %v934
      %1392 = vmatmul.mubr.bf16.gmra.mrb[0].mxu0 %v933
      %v1393 = vpop.f32.mrb[0].mxu0
      %v1394 = vadd.f32 0.0, %v1393
      %v1395 = vpop.f32.mrb[0].mxu0
      %v1396 = vpop.f32.mrb[0].mxu0
      %v1397 = vadd.f32 0.0, %v1396
      %v1398 = vpop.f32.mrb[0].mxu0
      %1399 = vmatprep.mubr.bf16.mxu0 %v937
      %1400 = vmatmul.mubr.bf16.gmra.mrb[0].mxu0 %v936
      %v1401 = vpop.f32.mrb[0].mxu0
      %v1402 = vadd.f32 0.0, %v1401
      %v1403 = vpop.f32.mrb[0].mxu0
      %v1404 = vpop.f32.mrb[0].mxu0
      %v1405 = vadd.f32 0.0, %v1404
      %v1406 = vpop.f32.mrb[0].mxu0
      %1407 = vmatprep.mubr.bf16.mxu0 %v940
      %1408 = vmatmul.mubr.bf16.gmra.mrb[0].mxu0 %v939
      %v1409 = vpop.f32.mrb[0].mxu0
      %v1410 = vadd.f32 0.0, %v1409
      %v1411 = vpop.f32.mrb[0].mxu0
      %v1412 = vpop.f32.mrb[0].mxu0
      %v1413 = vadd.f32 0.0, %v1412
      %v1414 = vpop.f32.mrb[0].mxu0
      %1415 = vmatprep.mubr.bf16.mxu0 %v943
      %1416 = vmatmul.mubr.bf16.gmra.mrb[0].mxu0 %v942
      %v1417 = vpop.f32.mrb[0].mxu0
      %v1418 = vadd.f32 0.0, %v1417
      %v1419 = vpop.f32.mrb[0].mxu0
      %v1420 = vpop.f32.mrb[0].mxu0
      %v1421 = vadd.f32 0.0, %v1420
      %v1422 = vpop.f32.mrb[0].mxu0
      %1423 = vmatprep.mubr.bf16.mxu0 %v946
      %1424 = vmatmul.mubr.bf16.gmra.mrb[0].mxu0 %v945
      %v1425 = vpop.f32.mrb[0].mxu0
      %v1426 = vadd.f32 0.0, %v1425
      %v1427 = vpop.f32.mrb[0].mxu0
      %v1428 = vpop.f32.mrb[0].mxu0
      %v1429 = vadd.f32 0.0, %v1428
      %v1430 = vpop.f32.mrb[0].mxu0
      %1431 = vmatprep.mubr.bf16.mxu0 %v949
      %1432 = vmatmul.mubr.bf16.gmra.mrb[0].mxu0 %v948
      %v1433 = vpop.f32.mrb[0].mxu0
      %v1434 = vadd.f32 0.0, %v1433
      %v1435 = vpop.f32.mrb[0].mxu0
      %v1436 = vpop.f32.mrb[0].mxu0
      %v1437 = vadd.f32 0.0, %v1436
      %v1438 = vpop.f32.mrb[0].mxu0
      %1439 = vmatprep.mubr.bf16.mxu0 %v952
      %1440 = vmatmul.mubr.bf16.gmra.mrb[0].mxu0 %v951
      %v1441 = vpop.f32.mrb[0].mxu0
      %v1442 = vadd.f32 0.0, %v1441
      %v1443 = vpop.f32.mrb[0].mxu0
      %v1444 = vpop.f32.mrb[0].mxu0
      %v1445 = vadd.f32 0.0, %v1444
      %v1446 = vpop.f32.mrb[0].mxu0
      %1447 = vmatprep.mubr.bf16.mxu0 %v955
      %1448 = vmatmul.mubr.bf16.gmra.mrb[0].mxu0 %v954
      %v1449 = vpop.f32.mrb[0].mxu0
      %v1450 = vadd.f32 0.0, %v1449
      %v1451 = vpop.f32.mrb[0].mxu0
      %v1452 = vpop.f32.mrb[0].mxu0
      %v1453 = vadd.f32 0.0, %v1452
      %v1454 = vpop.f32.mrb[0].mxu0
      %1455 = vmatprep.mubr.bf16.mxu0 %v958
      %1456 = vmatmul.mubr.bf16.gmra.mrb[0].mxu0 %v957
      %v1457 = vpop.f32.mrb[0].mxu0
      %v1458 = vadd.f32 0.0, %v1457
      %v1459 = vpop.f32.mrb[0].mxu0
      %v1460 = vpop.f32.mrb[0].mxu0
      %v1461 = vadd.f32 0.0, %v1460
      %v1462 = vpop.f32.mrb[0].mxu0
      %1463 = vmatprep.mubr.bf16.mxu0 %v961
      %1464 = vmatmul.mubr.bf16.gmra.mrb[0].mxu0 %v960
      %v1465 = vpop.f32.mrb[0].mxu0
      %v1466 = vadd.f32 0.0, %v1465
      %v1467 = vpop.f32.mrb[0].mxu0
      %v1468 = vpop.f32.mrb[0].mxu0
      %v1469 = vadd.f32 0.0, %v1468
      %v1470 = vpop.f32.mrb[0].mxu0
      %1471 = vmatprep.mubr.bf16.mxu0 %v964
      %1472 = vmatmul.mubr.bf16.gmra.mrb[0].mxu0 %v963
      %v1473 = vpop.f32.mrb[0].mxu0
      %v1474 = vadd.f32 0.0, %v1473
      %v1475 = vpop.f32.mrb[0].mxu0
      %v1476 = vpop.f32.mrb[0].mxu0
      %v1477 = vadd.f32 0.0, %v1476
      %v1478 = vpop.f32.mrb[0].mxu0
      %1479 = vmatprep.mubr.bf16.mxu0 %v967
      %1480 = vmatmul.mubr.bf16.gmra.mrb[0].mxu0 %v966
      %v1481 = vpop.f32.mrb[0].mxu0
      %v1482 = vadd.f32 0.0, %v1481
      %v1483 = vpop.f32.mrb[0].mxu0
      %v1484 = vpop.f32.mrb[0].mxu0
      %v1485 = vadd.f32 0.0, %v1484
      %v1486 = vpop.f32.mrb[0].mxu0
      %1487 = vmatprep.mubr.bf16.mxu0 %v970
      %1488 = vmatmul.mubr.bf16.gmra.mrb[0].mxu0 %v969
      %v1489 = vpop.f32.mrb[0].mxu0
      %v1490 = vadd.f32 0.0, %v1489
      %v1491 = vpop.f32.mrb[0].mxu0
      %v1492 = vpop.f32.mrb[0].mxu0
      %v1493 = vadd.f32 0.0, %v1492
      %v1494 = vpop.f32.mrb[0].mxu0
      %1495 = vmatprep.mubr.bf16.mxu0 %v973
      %1496 = vmatmul.mubr.bf16.gmra.mrb[0].mxu0 %v972
      %v1497 = vpop.f32.mrb[0].mxu0
      %v1498 = vadd.f32 0.0, %v1497
      %v1499 = vpop.f32.mrb[0].mxu0
      %v1500 = vpop.f32.mrb[0].mxu0
      %v1501 = vadd.f32 0.0, %v1500
      %v1502 = vpop.f32.mrb[0].mxu0
      %1503 = vmatprep.mubr.bf16.mxu0 %v976
      %1504 = vmatmul.mubr.bf16.gmra.mrb[0].mxu0 %v975
      %v1505 = vpop.f32.mrb[0].mxu0
      %v1506 = vadd.f32 0.0, %v1505
      %v1507 = vpop.f32.mrb[0].mxu0
      %v1508 = vpop.f32.mrb[0].mxu0
      %v1509 = vadd.f32 0.0, %v1508
      %v1510 = vpop.f32.mrb[0].mxu0
      %1511 = vmatprep.mubr.bf16.mxu0 %v979
      %1512 = vmatmul.mubr.bf16.gmra.mrb[0].mxu0 %v978
      %v1513 = vpop.f32.mrb[0].mxu0
      %v1514 = vadd.f32 0.0, %v1513
      %v1515 = vpop.f32.mrb[0].mxu0
      %v1516 = vpop.f32.mrb[0].mxu0
      %v1517 = vadd.f32 0.0, %v1516
      %v1518 = vpop.f32.mrb[0].mxu0
      %1519 = vdwg.mxu0
      %1520 = vmatprep.subr.bf16.mxu0 0
      %1521 = vmatpush1.bf16.msra.mxu0 %v1131
      %1522 = vmatprep.subr.bf16.mxu0 0
      %1523 = vmatpush1.bf16.msra.mxu0 %v1132
      %1524 = vmatprep.subr.bf16.mxu0 0
      %1525 = vmatpush1.bf16.msra.mxu0 %v1245
      %1526 = vmatprep.subr.bf16.mxu0 0
      %1527 = vmatpush1.bf16.msra.mxu0 0
      %1528 = vmatprep.subr.bf16.mxu0 0
      %1529 = vmatpush1.bf16.msra.mxu0 0
      %1530 = vmatprep.subr.bf16.mxu0 0
      %1531 = vmatpush1.bf16.msra.mxu0 0
      %1532 = vmatprep.subr.bf16.mxu0 0
      %1533 = vmatpush1.bf16.msra.mxu0 0
      %1534 = vmatprep.subr.bf16.mxu0 0
      %1535 = vmatpush1.bf16.msra.mxu0 0
      %1536 = vmatprep.subr.bf16.mxu0 0
      %1537 = vmatpush1.bf16.msra.mxu0 0
      %1538 = vmatprep.subr.bf16.mxu0 0
      %1539 = vmatpush1.bf16.msra.mxu0 0
      %1540 = vmatprep.subr.bf16.mxu0 0
      %1541 = vmatpush1.bf16.msra.mxu0 0
      %1542 = vmatprep.subr.bf16.mxu0 0
      %1543 = vmatpush1.bf16.msra.mxu0 0
      %1544 = vmatprep.subr.bf16.mxu0 0
      %1545 = vmatpush1.bf16.msra.mxu0 0
      %1546 = vmatprep.subr.bf16.mxu0 0
      %1547 = vmatpush1.bf16.msra.mxu0 0
      %1548 = vmatprep.subr.bf16.mxu0 0
      %1549 = vmatpush1.bf16.msra.mxu0 0
      %1550 = vmatprep.subr.bf16.mxu0 0
      %1551 = vmatpush1.bf16.msra.mxu0 0
      %1552 = vmatprep.mubr.bf16.mxu0 0
      %1553 = vmatmul.mubr.bf16.gmra.mrb[0].mxu0 %v1154
      %v1554 = vpop.f32.mrb[0].mxu0
      %v1555 = vadd.f32 %v1282, %v1554
      %v1556 = vpop.f32.mrb[0].mxu0
      %v1557 = vpop.f32.mrb[0].mxu0
      %v1558 = vadd.f32 %v1285, %v1557
      %v1559 = vpop.f32.mrb[0].mxu0
      %1560 = vmatprep.mubr.bf16.mxu0 0
      %1561 = vmatmul.mubr.bf16.gmra.mrb[0].mxu0 %v1157
      %v1562 = vpop.f32.mrb[0].mxu0
      %v1563 = vadd.f32 %v1290, %v1562
      %v1564 = vpop.f32.mrb[0].mxu0
      %v1565 = vpop.f32.mrb[0].mxu0
      %v1566 = vadd.f32 %v1293, %v1565
      %v1567 = vpop.f32.mrb[0].mxu0
      %1568 = vmatprep.mubr.bf16.mxu0 0
      %1569 = vmatmul.mubr.bf16.gmra.mrb[0].mxu0 %v1160
      %v1570 = vpop.f32.mrb[0].mxu0
      %v1571 = vadd.f32 %v1298, %v1570
      %v1572 = vpop.f32.mrb[0].mxu0
      %v1573 = vpop.f32.mrb[0].mxu0
      %v1574 = vadd.f32 %v1301, %v1573
      %v1575 = vpop.f32.mrb[0].mxu0
      %1576 = vmatprep.mubr.bf16.mxu0 0
      %1577 = vmatmul.mubr.bf16.gmra.mrb[0].mxu0 %v1163
      %v1578 = vpop.f32.mrb[0].mxu0
      %v1579 = vadd.f32 %v1306, %v1578
      %v1580 = vpop.f32.mrb[0].mxu0
      %v1581 = vpop.f32.mrb[0].mxu0
      %v1582 = vadd.f32 %v1309, %v1581
      %v1583 = vpop.f32.mrb[0].mxu0
      %1584 = vmatprep.mubr.bf16.mxu0 0
      %1585 = vmatmul.mubr.bf16.gmra.mrb[0].mxu0 %v1166
      %v1586 = vpop.f32.mrb[0].mxu0
      %v1587 = vadd.f32 %v1314, %v1586
      %v1588 = vpop.f32.mrb[0].mxu0
      %v1589 = vpop.f32.mrb[0].mxu0
      %v1590 = vadd.f32 %v1317, %v1589
      %v1591 = vpop.f32.mrb[0].mxu0
      %1592 = vmatprep.mubr.bf16.mxu0 0
      %1593 = vmatmul.mubr.bf16.gmra.mrb[0].mxu0 %v1169
      %v1594 = vpop.f32.mrb[0].mxu0
      %v1595 = vadd.f32 %v1322, %v1594
      %v1596 = vpop.f32.mrb[0].mxu0
      %v1597 = vpop.f32.mrb[0].mxu0
      %v1598 = vadd.f32 %v1325, %v1597
      %v1599 = vpop.f32.mrb[0].mxu0
      %1600 = vmatprep.mubr.bf16.mxu0 0
      %1601 = vmatmul.mubr.bf16.gmra.mrb[0].mxu0 %v1172
      %v1602 = vpop.f32.mrb[0].mxu0
      %v1603 = vadd.f32 %v1330, %v1602
      %v1604 = vpop.f32.mrb[0].mxu0
      %v1605 = vpop.f32.mrb[0].mxu0
      %v1606 = vadd.f32 %v1333, %v1605
      %v1607 = vpop.f32.mrb[0].mxu0
      %1608 = vmatprep.mubr.bf16.mxu0 0
      %1609 = vmatmul.mubr.bf16.gmra.mrb[0].mxu0 %v1175
      %v1610 = vpop.f32.mrb[0].mxu0
      %v1611 = vadd.f32 %v1338, %v1610
      %v1612 = vpop.f32.mrb[0].mxu0
      %v1613 = vpop.f32.mrb[0].mxu0
      %v1614 = vadd.f32 %v1341, %v1613
      %v1615 = vpop.f32.mrb[0].mxu0
      %1616 = vmatprep.mubr.bf16.mxu0 0
      %1617 = vmatmul.mubr.bf16.gmra.mrb[0].mxu0 %v1178
      %v1618 = vpop.f32.mrb[0].mxu0
      %v1619 = vadd.f32 %v1346, %v1618
      %v1620 = vpop.f32.mrb[0].mxu0
      %v1621 = vpop.f32.mrb[0].mxu0
      %v1622 = vadd.f32 %v1349, %v1621
      %v1623 = vpop.f32.mrb[0].mxu0
      %1624 = vmatprep.mubr.bf16.mxu0 0
      %1625 = vmatmul.mubr.bf16.gmra.mrb[0].mxu0 %v1181
      %v1626 = vpop.f32.mrb[0].mxu0
      %v1627 = vadd.f32 %v1354, %v1626
      %v1628 = vpop.f32.mrb[0].mxu0
      %v1629 = vpop.f32.mrb[0].mxu0
      %v1630 = vadd.f32 %v1357, %v1629
      %v1631 = vpop.f32.mrb[0].mxu0
      %1632 = vmatprep.mubr.bf16.mxu0 0
      %1633 = vmatmul.mubr.bf16.gmra.mrb[0].mxu0 %v1184
      %v1634 = vpop.f32.mrb[0].mxu0
      %v1635 = vadd.f32 %v1362, %v1634
      %v1636 = vpop.f32.mrb[0].mxu0
      %v1637 = vpop.f32.mrb[0].mxu0
      %v1638 = vadd.f32 %v1365, %v1637
      %v1639 = vpop.f32.mrb[0].mxu0
      %1640 = vmatprep.mubr.bf16.mxu0 0
      %1641 = vmatmul.mubr.bf16.gmra.mrb[0].mxu0 %v1187
      %v1642 = vpop.f32.mrb[0].mxu0
      %v1643 = vadd.f32 %v1370, %v1642
      %v1644 = vpop.f32.mrb[0].mxu0
      %v1645 = vpop.f32.mrb[0].mxu0
      %v1646 = vadd.f32 %v1373, %v1645
      %v1647 = vpop.f32.mrb[0].mxu0
      %1648 = vmatprep.mubr.bf16.mxu0 0
      %1649 = vmatmul.mubr.bf16.gmra.mrb[0].mxu0 %v1190
      %v1650 = vpop.f32.mrb[0].mxu0
      %v1651 = vadd.f32 %v1378, %v1650
      %v1652 = vpop.f32.mrb[0].mxu0
      %v1653 = vpop.f32.mrb[0].mxu0
      %v1654 = vadd.f32 %v1381, %v1653
      %v1655 = vpop.f32.mrb[0].mxu0
      %1656 = vmatprep.mubr.bf16.mxu0 0
      %1657 = vmatmul.mubr.bf16.gmra.mrb[0].mxu0 %v1193
      %v1658 = vpop.f32.mrb[0].mxu0
      %v1659 = vadd.f32 %v1386, %v1658
      %v1660 = vpop.f32.mrb[0].mxu0
      %v1661 = vpop.f32.mrb[0].mxu0
      %v1662 = vadd.f32 %v1389, %v1661
      %v1663 = vpop.f32.mrb[0].mxu0
      %1664 = vmatprep.mubr.bf16.mxu0 0
      %1665 = vmatmul.mubr.bf16.gmra.mrb[0].mxu0 %v1196
      %v1666 = vpop.f32.mrb[0].mxu0
      %v1667 = vadd.f32 %v1394, %v1666
      %v1668 = vpop.f32.mrb[0].mxu0
      %v1669 = vpop.f32.mrb[0].mxu0
      %v1670 = vadd.f32 %v1397, %v1669
      %v1671 = vpop.f32.mrb[0].mxu0
      %1672 = vmatprep.mubr.bf16.mxu0 0
      %1673 = vmatmul.mubr.bf16.gmra.mrb[0].mxu0 %v1199
      %v1674 = vpop.f32.mrb[0].mxu0
      %v1675 = vadd.f32 %v1402, %v1674
      %v1676 = vpop.f32.mrb[0].mxu0
      %v1677 = vpop.f32.mrb[0].mxu0
      %v1678 = vadd.f32 %v1405, %v1677
      %v1679 = vpop.f32.mrb[0].mxu0
      %1680 = vmatprep.mubr.bf16.mxu0 0
      %1681 = vmatmul.mubr.bf16.gmra.mrb[0].mxu0 %v1202
      %v1682 = vpop.f32.mrb[0].mxu0
      %v1683 = vadd.f32 %v1410, %v1682
      %v1684 = vpop.f32.mrb[0].mxu0
      %v1685 = vpop.f32.mrb[0].mxu0
      %v1686 = vadd.f32 %v1413, %v1685
      %v1687 = vpop.f32.mrb[0].mxu0
      %1688 = vmatprep.mubr.bf16.mxu0 0
      %1689 = vmatmul.mubr.bf16.gmra.mrb[0].mxu0 %v1205
      %v1690 = vpop.f32.mrb[0].mxu0
      %v1691 = vadd.f32 %v1418, %v1690
      %v1692 = vpop.f32.mrb[0].mxu0
      %v1693 = vpop.f32.mrb[0].mxu0
      %v1694 = vadd.f32 %v1421, %v1693
      %v1695 = vpop.f32.mrb[0].mxu0
      %1696 = vmatprep.mubr.bf16.mxu0 0
      %1697 = vmatmul.mubr.bf16.gmra.mrb[0].mxu0 %v1208
      %v1698 = vpop.f32.mrb[0].mxu0
      %v1699 = vadd.f32 %v1426, %v1698
      %v1700 = vpop.f32.mrb[0].mxu0
      %v1701 = vpop.f32.mrb[0].mxu0
      %v1702 = vadd.f32 %v1429, %v1701
      %v1703 = vpop.f32.mrb[0].mxu0
      %1704 = vmatprep.mubr.bf16.mxu0 0
      %1705 = vmatmul.mubr.bf16.gmra.mrb[0].mxu0 %v1211
      %v1706 = vpop.f32.mrb[0].mxu0
      %v1707 = vadd.f32 %v1434, %v1706
      %v1708 = vpop.f32.mrb[0].mxu0
      %v1709 = vpop.f32.mrb[0].mxu0
      %v1710 = vadd.f32 %v1437, %v1709
      %v1711 = vpop.f32.mrb[0].mxu0
      %1712 = vmatprep.mubr.bf16.mxu0 0
      %1713 = vmatmul.mubr.bf16.gmra.mrb[0].mxu0 %v1214
      %v1714 = vpop.f32.mrb[0].mxu0
      %v1715 = vadd.f32 %v1442, %v1714
      %v1716 = vpop.f32.mrb[0].mxu0
      %v1717 = vpop.f32.mrb[0].mxu0
      %v1718 = vadd.f32 %v1445, %v1717
      %v1719 = vpop.f32.mrb[0].mxu0
      %1720 = vmatprep.mubr.bf16.mxu0 0
      %1721 = vmatmul.mubr.bf16.gmra.mrb[0].mxu0 %v1217
      %v1722 = vpop.f32.mrb[0].mxu0
      %v1723 = vadd.f32 %v1450, %v1722
      %v1724 = vpop.f32.mrb[0].mxu0
      %v1725 = vpop.f32.mrb[0].mxu0
      %v1726 = vadd.f32 %v1453, %v1725
      %v1727 = vpop.f32.mrb[0].mxu0
      %1728 = vmatprep.mubr.bf16.mxu0 0
      %1729 = vmatmul.mubr.bf16.gmra.mrb[0].mxu0 %v1220
      %v1730 = vpop.f32.mrb[0].mxu0
      %v1731 = vadd.f32 %v1458, %v1730
      %v1732 = vpop.f32.mrb[0].mxu0
      %v1733 = vpop.f32.mrb[0].mxu0
      %v1734 = vadd.f32 %v1461, %v1733
      %v1735 = vpop.f32.mrb[0].mxu0
      %1736 = vmatprep.mubr.bf16.mxu0 0
      %1737 = vmatmul.mubr.bf16.gmra.mrb[0].mxu0 %v1223
      %v1738 = vpop.f32.mrb[0].mxu0
      %v1739 = vadd.f32 %v1466, %v1738
      %v1740 = vpop.f32.mrb[0].mxu0
      %v1741 = vpop.f32.mrb[0].mxu0
      %v1742 = vadd.f32 %v1469, %v1741
      %v1743 = vpop.f32.mrb[0].mxu0
      %1744 = vmatprep.mubr.bf16.mxu0 0
      %1745 = vmatmul.mubr.bf16.gmra.mrb[0].mxu0 %v1226
      %v1746 = vpop.f32.mrb[0].mxu0
      %v1747 = vadd.f32 %v1474, %v1746
      %v1748 = vpop.f32.mrb[0].mxu0
      %v1749 = vpop.f32.mrb[0].mxu0
      %v1750 = vadd.f32 %v1477, %v1749
      %v1751 = vpop.f32.mrb[0].mxu0
      %1752 = vmatprep.mubr.bf16.mxu0 0
      %1753 = vmatmul.mubr.bf16.gmra.mrb[0].mxu0 %v1229
      %v1754 = vpop.f32.mrb[0].mxu0
      %v1755 = vadd.f32 %v1482, %v1754
      %v1756 = vpop.f32.mrb[0].mxu0
      %v1757 = vpop.f32.mrb[0].mxu0
      %v1758 = vadd.f32 %v1485, %v1757
      %v1759 = vpop.f32.mrb[0].mxu0
      %1760 = vmatprep.mubr.bf16.mxu0 0
      %1761 = vmatmul.mubr.bf16.gmra.mrb[0].mxu0 %v1232
      %v1762 = vpop.f32.mrb[0].mxu0
      %v1763 = vadd.f32 %v1490, %v1762
      %v1764 = vpop.f32.mrb[0].mxu0
      %v1765 = vpop.f32.mrb[0].mxu0
      %v1766 = vadd.f32 %v1493, %v1765
      %v1767 = vpop.f32.mrb[0].mxu0
      %1768 = vmatprep.mubr.bf16.mxu0 0
      %1769 = vmatmul.mubr.bf16.gmra.mrb[0].mxu0 %v1235
      %v1770 = vpop.f32.mrb[0].mxu0
      %v1771 = vadd.f32 %v1498, %v1770
      %v1772 = vpop.f32.mrb[0].mxu0
      %v1773 = vpop.f32.mrb[0].mxu0
      %v1774 = vadd.f32 %v1501, %v1773
      %v1775 = vpop.f32.mrb[0].mxu0
      %1776 = vmatprep.mubr.bf16.mxu0 0
      %1777 = vmatmul.mubr.bf16.gmra.mrb[0].mxu0 %v1238
      %v1778 = vpop.f32.mrb[0].mxu0
      %v1779 = vadd.f32 %v1506, %v1778
      %v1780 = vpop.f32.mrb[0].mxu0
      %v1781 = vpop.f32.mrb[0].mxu0
      %v1782 = vadd.f32 %v1509, %v1781
      %v1783 = vpop.f32.mrb[0].mxu0
      %1784 = vmatprep.mubr.bf16.mxu0 0
      %1785 = vmatmul.mubr.bf16.gmra.mrb[0].mxu0 %v1241
      %v1786 = vpop.f32.mrb[0].mxu0
      %v1787 = vadd.f32 %v1514, %v1786
      %v1788 = vpop.f32.mrb[0].mxu0
      %v1789 = vpop.f32.mrb[0].mxu0
      %v1790 = vadd.f32 %v1517, %v1789
      %v1791 = vpop.f32.mrb[0].mxu0
      %1792 = vdwg.mxu0
      %v1793 = vadd.f32 %v374, %v1555
      %v1794 = vadd.f32 %v375, %v1558
      %v1795 = vadd.f32 %v376, %v1563
      %v1796 = vadd.f32 %v377, %v1566
      %v1797 = vadd.f32 %v378, %v1571
      %v1798 = vadd.f32 %v379, %v1574
      %v1799 = vadd.f32 %v380, %v1579
      %v1800 = vadd.f32 %v381, %v1582
      %v1801 = vadd.f32 %v382, %v1587
      %v1802 = vadd.f32 %v383, %v1590
      %v1803 = vadd.f32 %v384, %v1595
      %v1804 = vadd.f32 %v385, %v1598
      %v1805 = vadd.f32 %v386, %v1603
      %v1806 = vadd.f32 %v387, %v1606
      %v1807 = vadd.f32 %v388, %v1611
      %v1808 = vadd.f32 %v389, %v1614
      %v1809 = vadd.f32 %v390, %v1619
      %v1810 = vadd.f32 %v391, %v1622
      %v1811 = vadd.f32 %v392, %v1627
      %v1812 = vadd.f32 %v393, %v1630
      %v1813 = vadd.f32 %v394, %v1635
      %v1814 = vadd.f32 %v395, %v1638
      %v1815 = vadd.f32 %v396, %v1643
      %v1816 = vadd.f32 %v397, %v1646
      %v1817 = vadd.f32 %v398, %v1651
      %v1818 = vadd.f32 %v399, %v1654
      %v1819 = vadd.f32 %v400, %v1659
      %v1820 = vadd.f32 %v401, %v1662
      %v1821 = vadd.f32 %v402, %v1667
      %v1822 = vadd.f32 %v403, %v1670
      %v1823 = vadd.f32 %v404, %v1675
      %v1824 = vadd.f32 %v405, %v1678
      %v1825 = vadd.f32 %v406, %v1683
      %v1826 = vadd.f32 %v407, %v1686
      %v1827 = vadd.f32 %v408, %v1691
      %v1828 = vadd.f32 %v409, %v1694
      %v1829 = vadd.f32 %v410, %v1699
      %v1830 = vadd.f32 %v411, %v1702
      %v1831 = vadd.f32 %v412, %v1707
      %v1832 = vadd.f32 %v413, %v1710
      %v1833 = vadd.f32 %v414, %v1715
      %v1834 = vadd.f32 %v415, %v1718
      %v1835 = vadd.f32 %v416, %v1723
      %v1836 = vadd.f32 %v417, %v1726
      %v1837 = vadd.f32 %v418, %v1731
      %v1838 = vadd.f32 %v419, %v1734
      %v1839 = vadd.f32 %v420, %v1739
      %v1840 = vadd.f32 %v421, %v1742
      %v1841 = vadd.f32 %v422, %v1747
      %v1842 = vadd.f32 %v423, %v1750
      %v1843 = vadd.f32 %v424, %v1755
      %v1844 = vadd.f32 %v425, %v1758
      %v1845 = vadd.f32 %v426, %v1763
      %v1846 = vadd.f32 %v427, %v1766
      %v1847 = vadd.f32 %v428, %v1771
      %v1848 = vadd.f32 %v429, %v1774
      %v1849 = vadd.f32 %v430, %v1779
      %v1850 = vadd.f32 %v431, %v1782
      %v1851 = vadd.f32 %v432, %v1787
      %v1852 = vadd.f32 %v433, %v1790
      %vm1853 = vcmask 523264
      %1854 = vst.msk [vmem:[#allocation2] sm:$0xff] %vm1853, %v1793
      %1855 = vst.msk [vmem:[#allocation2 + $0x8] sm:$0xff] %vm1853, %v1794
      %1856 = vst.msk [vmem:[#allocation2 + $0x10] sm:$0xff] %vm1853, %v1795
      %1857 = vst.msk [vmem:[#allocation2 + $0x18] sm:$0xff] %vm1853, %v1796
      %1858 = vst.msk [vmem:[#allocation2 + $0x20] sm:$0xff] %vm1853, %v1797
      %1859 = vst.msk [vmem:[#allocation2 + $0x28] sm:$0xff] %vm1853, %v1798
      %1860 = vst.msk [vmem:[#allocation2 + $0x30] sm:$0xff] %vm1853, %v1799
      %1861 = vst.msk [vmem:[#allocation2 + $0x38] sm:$0xff] %vm1853, %v1800
      %1862 = vst.msk [vmem:[#allocation2 + $0x40] sm:$0xff] %vm1853, %v1801
      %1863 = vst.msk [vmem:[#allocation2 + $0x48] sm:$0xff] %vm1853, %v1802
      %1864 = vst.msk [vmem:[#allocation2 + $0x50] sm:$0xff] %vm1853, %v1803
      %1865 = vst.msk [vmem:[#allocation2 + $0x58] sm:$0xff] %vm1853, %v1804
      %1866 = vst.msk [vmem:[#allocation2 + $0x60] sm:$0xff] %vm1853, %v1805
      %1867 = vst.msk [vmem:[#allocation2 + $0x68] sm:$0xff] %vm1853, %v1806
      %1868 = vst.msk [vmem:[#allocation2 + $0x70] sm:$0xff] %vm1853, %v1807
      %1869 = vst.msk [vmem:[#allocation2 + $0x78] sm:$0xff] %vm1853, %v1808
      %1870 = vst.msk [vmem:[#allocation2 + $0x80] sm:$0xff] %vm1853, %v1809
      %1871 = vst.msk [vmem:[#allocation2 + $0x88] sm:$0xff] %vm1853, %v1810
      %1872 = vst.msk [vmem:[#allocation2 + $0x90] sm:$0xff] %vm1853, %v1811
      %1873 = vst.msk [vmem:[#allocation2 + $0x98] sm:$0xff] %vm1853, %v1812
      %1874 = vst.msk [vmem:[#allocation2 + $0xa0] sm:$0xff] %vm1853, %v1813
      %1875 = vst.msk [vmem:[#allocation2 + $0xa8] sm:$0xff] %vm1853, %v1814
      %1876 = vst.msk [vmem:[#allocation2 + $0xb0] sm:$0xff] %vm1853, %v1815
      %1877 = vst.msk [vmem:[#allocation2 + $0xb8] sm:$0xff] %vm1853, %v1816
      %1878 = vst.msk [vmem:[#allocation2 + $0xc0] sm:$0xff] %vm1853, %v1817
      %1879 = vst.msk [vmem:[#allocation2 + $0xc8] sm:$0xff] %vm1853, %v1818
      %1880 = vst.msk [vmem:[#allocation2 + $0xd0] sm:$0xff] %vm1853, %v1819
      %1881 = vst.msk [vmem:[#allocation2 + $0xd8] sm:$0xff] %vm1853, %v1820
      %1882 = vst.msk [vmem:[#allocation2 + $0xe0] sm:$0xff] %vm1853, %v1821
      %1883 = vst.msk [vmem:[#allocation2 + $0xe8] sm:$0xff] %vm1853, %v1822
      %1884 = vst.msk [vmem:[#allocation2 + $0xf0] sm:$0xff] %vm1853, %v1823
      %1885 = vst.msk [vmem:[#allocation2 + $0xf8] sm:$0xff] %vm1853, %v1824
      %1886 = vst.msk [vmem:[#allocation2 + $0x100] sm:$0xff] %vm1853, %v1825
      %1887 = vst.msk [vmem:[#allocation2 + $0x108] sm:$0xff] %vm1853, %v1826
      %1888 = vst.msk [vmem:[#allocation2 + $0x110] sm:$0xff] %vm1853, %v1827
      %1889 = vst.msk [vmem:[#allocation2 + $0x118] sm:$0xff] %vm1853, %v1828
      %1890 = vst.msk [vmem:[#allocation2 + $0x120] sm:$0xff] %vm1853, %v1829
      %1891 = vst.msk [vmem:[#allocation2 + $0x128] sm:$0xff] %vm1853, %v1830
      %1892 = vst.msk [vmem:[#allocation2 + $0x130] sm:$0xff] %vm1853, %v1831
      %1893 = vst.msk [vmem:[#allocation2 + $0x138] sm:$0xff] %vm1853, %v1832
      %1894 = vst.msk [vmem:[#allocation2 + $0x140] sm:$0xff] %vm1853, %v1833
      %1895 = vst.msk [vmem:[#allocation2 + $0x148] sm:$0xff] %vm1853, %v1834
      %1896 = vst.msk [vmem:[#allocation2 + $0x150] sm:$0xff] %vm1853, %v1835
      %1897 = vst.msk [vmem:[#allocation2 + $0x158] sm:$0xff] %vm1853, %v1836
      %1898 = vst.msk [vmem:[#allocation2 + $0x160] sm:$0xff] %vm1853, %v1837
      %1899 = vst.msk [vmem:[#allocation2 + $0x168] sm:$0xff] %vm1853, %v1838
      %1900 = vst.msk [vmem:[#allocation2 + $0x170] sm:$0xff] %vm1853, %v1839
      %1901 = vst.msk [vmem:[#allocation2 + $0x178] sm:$0xff] %vm1853, %v1840
      %1902 = vst.msk [vmem:[#allocation2 + $0x180] sm:$0xff] %vm1853, %v1841
      %1903 = vst.msk [vmem:[#allocation2 + $0x188] sm:$0xff] %vm1853, %v1842
      %1904 = vst.msk [vmem:[#allocation2 + $0x190] sm:$0xff] %vm1853, %v1843
      %1905 = vst.msk [vmem:[#allocation2 + $0x198] sm:$0xff] %vm1853, %v1844
      %1906 = vst.msk [vmem:[#allocation2 + $0x1a0] sm:$0xff] %vm1853, %v1845
      %1907 = vst.msk [vmem:[#allocation2 + $0x1a8] sm:$0xff] %vm1853, %v1846
      %1908 = vst.msk [vmem:[#allocation2 + $0x1b0] sm:$0xff] %vm1853, %v1847
      %1909 = vst.msk [vmem:[#allocation2 + $0x1b8] sm:$0xff] %vm1853, %v1848
      %1910 = vst.msk [vmem:[#allocation2 + $0x1c0] sm:$0xff] %vm1853, %v1849
      %1911 = vst.msk [vmem:[#allocation2 + $0x1c8] sm:$0xff] %vm1853, %v1850
      %1912 = vst.msk [vmem:[#allocation2 + $0x1d0] sm:$0xff] %vm1853, %v1851
      %1913 = vst.msk [vmem:[#allocation2 + $0x1d8] sm:$0xff] %vm1853, %v1852
      // Predicated region
      $region41: #{matmul_affine.1} parent=35 // pred_check
        %p1914 = pneg %p309
      $region42: #{matmul_affine.1} parent=35 // pred_check_branch
        %1916 = sbr.rel (%p1914) target = $region44
      $region43: #{matmul_affine.1} parent=35 // pred_region
        %v1917 = vld [vmem:[#allocation2] sm:$0xff]
        %v1918 = vld [vmem:[#allocation2 + $0x8] sm:$0xff]
        %v1919 = vld [vmem:[#allocation2 + $0x10] sm:$0xff]
        %v1920 = vld [vmem:[#allocation2 + $0x18] sm:$0xff]
        %v1921 = vld [vmem:[#allocation2 + $0x20] sm:$0xff]
        %v1922 = vld [vmem:[#allocation2 + $0x28] sm:$0xff]
        %v1923 = vld [vmem:[#allocation2 + $0x30] sm:$0xff]
        %v1924 = vld [vmem:[#allocation2 + $0x38] sm:$0xff]
        %v1925 = vld [vmem:[#allocation2 + $0x40] sm:$0xff]
        %v1926 = vld [vmem:[#allocation2 + $0x48] sm:$0xff]
        %v1927 = vld [vmem:[#allocation2 + $0x50] sm:$0xff]
        %v1928 = vld [vmem:[#allocation2 + $0x58] sm:$0xff]
        %v1929 = vld [vmem:[#allocation2 + $0x60] sm:$0xff]
        %v1930 = vld [vmem:[#allocation2 + $0x68] sm:$0xff]
        %v1931 = vld [vmem:[#allocation2 + $0x70] sm:$0xff]
        %v1932 = vld [vmem:[#allocation2 + $0x78] sm:$0xff]
        %v1933 = vld [vmem:[#allocation2 + $0x80] sm:$0xff]
        %v1934 = vld [vmem:[#allocation2 + $0x88] sm:$0xff]
        %v1935 = vld [vmem:[#allocation2 + $0x90] sm:$0xff]
        %v1936 = vld [vmem:[#allocation2 + $0x98] sm:$0xff]
        %v1937 = vld [vmem:[#allocation2 + $0xa0] sm:$0xff]
        %v1938 = vld [vmem:[#allocation2 + $0xa8] sm:$0xff]
        %v1939 = vld [vmem:[#allocation2 + $0xb0] sm:$0xff]
        %v1940 = vld [vmem:[#allocation2 + $0xb8] sm:$0xff]
        %v1941 = vld [vmem:[#allocation2 + $0xc0] sm:$0xff]
        %v1942 = vld [vmem:[#allocation2 + $0xc8] sm:$0xff]
        %v1943 = vld [vmem:[#allocation2 + $0xd0] sm:$0xff]
        %v1944 = vld [vmem:[#allocation2 + $0xd8] sm:$0xff]
        %v1945 = vld [vmem:[#allocation2 + $0xe0] sm:$0xff]
        %v1946 = vld [vmem:[#allocation2 + $0xe8] sm:$0xff]
        %v1947 = vld [vmem:[#allocation2 + $0xf0] sm:$0xff]
        %v1948 = vld [vmem:[#allocation2 + $0xf8] sm:$0xff]
        %v1949 = vld [vmem:[#allocation2 + $0x100] sm:$0xff]
        %v1950 = vld [vmem:[#allocation2 + $0x108] sm:$0xff]
        %v1951 = vld [vmem:[#allocation2 + $0x110] sm:$0xff]
        %v1952 = vld [vmem:[#allocation2 + $0x118] sm:$0xff]
        %v1953 = vld [vmem:[#allocation2 + $0x120] sm:$0xff]
        %v1954 = vld [vmem:[#allocation2 + $0x128] sm:$0xff]
        %v1955 = vld [vmem:[#allocation2 + $0x130] sm:$0xff]
        %v1956 = vld [vmem:[#allocation2 + $0x138] sm:$0xff]
        %v1957 = vld [vmem:[#allocation2 + $0x140] sm:$0xff]
        %v1958 = vld [vmem:[#allocation2 + $0x148] sm:$0xff]
        %v1959 = vld [vmem:[#allocation2 + $0x150] sm:$0xff]
        %v1960 = vld [vmem:[#allocation2 + $0x158] sm:$0xff]
        %v1961 = vld [vmem:[#allocation2 + $0x160] sm:$0xff]
        %v1962 = vld [vmem:[#allocation2 + $0x168] sm:$0xff]
        %v1963 = vld [vmem:[#allocation2 + $0x170] sm:$0xff]
        %v1964 = vld [vmem:[#allocation2 + $0x178] sm:$0xff]
        %v1965 = vld [vmem:[#allocation2 + $0x180] sm:$0xff]
        %v1966 = vld [vmem:[#allocation2 + $0x188] sm:$0xff]
        %v1967 = vld [vmem:[#allocation2 + $0x190] sm:$0xff]
        %v1968 = vld [vmem:[#allocation2 + $0x198] sm:$0xff]
        %v1969 = vld [vmem:[#allocation2 + $0x1a0] sm:$0xff]
        %v1970 = vld [vmem:[#allocation2 + $0x1a8] sm:$0xff]
        %v1971 = vld [vmem:[#allocation2 + $0x1b0] sm:$0xff]
        %v1972 = vld [vmem:[#allocation2 + $0x1b8] sm:$0xff]
        %v1973 = vld [vmem:[#allocation2 + $0x1c0] sm:$0xff]
        %v1974 = vld [vmem:[#allocation2 + $0x1c8] sm:$0xff]
        %v1975 = vld [vmem:[#allocation2 + $0x1d0] sm:$0xff]
        %v1976 = vld [vmem:[#allocation2 + $0x1d8] sm:$0xff]
        %v1977 = vld [vmem:[%s295] sm:$0x1]
        %v1979 = vlaneseq
        %v1980 = vshrl.u32 %v1979, 7
        %v1981 = vsub.s32 0, %v1980
        %v1982 = vrot.slane %v1977, %v1981
        %v1984 = vmul.f32 %v1917, %v1982
        %v1985 = vmul.f32 %v1918, %v1982
        %v1986 = vmul.f32 %v1919, %v1982
        %v1987 = vmul.f32 %v1920, %v1982
        %v1988 = vmul.f32 %v1921, %v1982
        %v1989 = vmul.f32 %v1922, %v1982
        %v1990 = vmul.f32 %v1923, %v1982
        %v1991 = vmul.f32 %v1924, %v1982
        %v1992 = vmul.f32 %v1925, %v1982
        %v1993 = vmul.f32 %v1926, %v1982
        %v1994 = vmul.f32 %v1927, %v1982
        %v1995 = vmul.f32 %v1928, %v1982
        %v1996 = vmul.f32 %v1929, %v1982
        %v1997 = vmul.f32 %v1930, %v1982
        %v1998 = vmul.f32 %v1931, %v1982
        %v1999 = vmul.f32 %v1932, %v1982
        %v2000 = vmul.f32 %v1933, %v1982
        %v2001 = vmul.f32 %v1934, %v1982
        %v2002 = vmul.f32 %v1935, %v1982
        %v2003 = vmul.f32 %v1936, %v1982
        %v2004 = vmul.f32 %v1937, %v1982
        %v2005 = vmul.f32 %v1938, %v1982
        %v2006 = vmul.f32 %v1939, %v1982
        %v2007 = vmul.f32 %v1940, %v1982
        %v2008 = vmul.f32 %v1941, %v1982
        %v2009 = vmul.f32 %v1942, %v1982
        %v2010 = vmul.f32 %v1943, %v1982
        %v2011 = vmul.f32 %v1944, %v1982
        %v2012 = vmul.f32 %v1945, %v1982
        %v2013 = vmul.f32 %v1946, %v1982
        %v2014 = vmul.f32 %v1947, %v1982
        %v2015 = vmul.f32 %v1948, %v1982
        %v2016 = vmul.f32 %v1949, %v1982
        %v2017 = vmul.f32 %v1950, %v1982
        %v2018 = vmul.f32 %v1951, %v1982
        %v2019 = vmul.f32 %v1952, %v1982
        %v2020 = vmul.f32 %v1953, %v1982
        %v2021 = vmul.f32 %v1954, %v1982
        %v2022 = vmul.f32 %v1955, %v1982
        %v2023 = vmul.f32 %v1956, %v1982
        %v2024 = vmul.f32 %v1957, %v1982
        %v2025 = vmul.f32 %v1958, %v1982
        %v2026 = vmul.f32 %v1959, %v1982
        %v2027 = vmul.f32 %v1960, %v1982
        %v2028 = vmul.f32 %v1961, %v1982
        %v2029 = vmul.f32 %v1962, %v1982
        %v2030 = vmul.f32 %v1963, %v1982
        %v2031 = vmul.f32 %v1964, %v1982
        %v2032 = vmul.f32 %v1965, %v1982
        %v2033 = vmul.f32 %v1966, %v1982
        %v2034 = vmul.f32 %v1967, %v1982
        %v2035 = vmul.f32 %v1968, %v1982
        %v2036 = vmul.f32 %v1969, %v1982
        %v2037 = vmul.f32 %v1970, %v1982
        %v2038 = vmul.f32 %v1971, %v1982
        %v2039 = vmul.f32 %v1972, %v1982
        %v2040 = vmul.f32 %v1973, %v1982
        %v2041 = vmul.f32 %v1974, %v1982
        %v2042 = vmul.f32 %v1975, %v1982
        %v2043 = vmul.f32 %v1976, %v1982
        %v2044 = vld [vmem:[%s298] sm:$0x1]
        %v2046 = vlaneseq
        %v2047 = vshrl.u32 %v2046, 7
        %v2048 = vsub.s32 0, %v2047
        %v2049 = vrot.slane %v2044, %v2048
        %v2051 = vadd.f32 %v1984, %v2049
        %v2052 = vadd.f32 %v1985, %v2049
        %v2053 = vadd.f32 %v1986, %v2049
        %v2054 = vadd.f32 %v1987, %v2049
        %v2055 = vadd.f32 %v1988, %v2049
        %v2056 = vadd.f32 %v1989, %v2049
        %v2057 = vadd.f32 %v1990, %v2049
        %v2058 = vadd.f32 %v1991, %v2049
        %v2059 = vadd.f32 %v1992, %v2049
        %v2060 = vadd.f32 %v1993, %v2049
        %v2061 = vadd.f32 %v1994, %v2049
        %v2062 = vadd.f32 %v1995, %v2049
        %v2063 = vadd.f32 %v1996, %v2049
        %v2064 = vadd.f32 %v1997, %v2049
        %v2065 = vadd.f32 %v1998, %v2049
        %v2066 = vadd.f32 %v1999, %v2049
        %v2067 = vadd.f32 %v2000, %v2049
        %v2068 = vadd.f32 %v2001, %v2049
        %v2069 = vadd.f32 %v2002, %v2049
        %v2070 = vadd.f32 %v2003, %v2049
        %v2071 = vadd.f32 %v2004, %v2049
        %v2072 = vadd.f32 %v2005, %v2049
        %v2073 = vadd.f32 %v2006, %v2049
        %v2074 = vadd.f32 %v2007, %v2049
        %v2075 = vadd.f32 %v2008, %v2049
        %v2076 = vadd.f32 %v2009, %v2049
        %v2077 = vadd.f32 %v2010, %v2049
        %v2078 = vadd.f32 %v2011, %v2049
        %v2079 = vadd.f32 %v2012, %v2049
        %v2080 = vadd.f32 %v2013, %v2049
        %v2081 = vadd.f32 %v2014, %v2049
        %v2082 = vadd.f32 %v2015, %v2049
        %v2083 = vadd.f32 %v2016, %v2049
        %v2084 = vadd.f32 %v2017, %v2049
        %v2085 = vadd.f32 %v2018, %v2049
        %v2086 = vadd.f32 %v2019, %v2049
        %v2087 = vadd.f32 %v2020, %v2049
        %v2088 = vadd.f32 %v2021, %v2049
        %v2089 = vadd.f32 %v2022, %v2049
        %v2090 = vadd.f32 %v2023, %v2049
        %v2091 = vadd.f32 %v2024, %v2049
        %v2092 = vadd.f32 %v2025, %v2049
        %v2093 = vadd.f32 %v2026, %v2049
        %v2094 = vadd.f32 %v2027, %v2049
        %v2095 = vadd.f32 %v2028, %v2049
        %v2096 = vadd.f32 %v2029, %v2049
        %v2097 = vadd.f32 %v2030, %v2049
        %v2098 = vadd.f32 %v2031, %v2049
        %v2099 = vadd.f32 %v2032, %v2049
        %v2100 = vadd.f32 %v2033, %v2049
        %v2101 = vadd.f32 %v2034, %v2049
        %v2102 = vadd.f32 %v2035, %v2049
        %v2103 = vadd.f32 %v2036, %v2049
        %v2104 = vadd.f32 %v2037, %v2049
        %v2105 = vadd.f32 %v2038, %v2049
        %v2106 = vadd.f32 %v2039, %v2049
        %v2107 = vadd.f32 %v2040, %v2049
        %v2108 = vadd.f32 %v2041, %v2049
        %v2109 = vadd.f32 %v2042, %v2049
        %v2110 = vadd.f32 %v2043, %v2049
        %v2111 = vmax.f32 %v2051, 0.0
        %v2112 = vmax.f32 %v2052, 0.0
        %v2113 = vmax.f32 %v2053, 0.0
        %v2114 = vmax.f32 %v2054, 0.0
        %v2115 = vmax.f32 %v2055, 0.0
        %v2116 = vmax.f32 %v2056, 0.0
        %v2117 = vmax.f32 %v2057, 0.0
        %v2118 = vmax.f32 %v2058, 0.0
        %v2119 = vmax.f32 %v2059, 0.0
        %v2120 = vmax.f32 %v2060, 0.0
        %v2121 = vmax.f32 %v2061, 0.0
        %v2122 = vmax.f32 %v2062, 0.0
        %v2123 = vmax.f32 %v2063, 0.0
        %v2124 = vmax.f32 %v2064, 0.0
        %v2125 = vmax.f32 %v2065, 0.0
        %v2126 = vmax.f32 %v2066, 0.0
        %v2127 = vmax.f32 %v2067, 0.0
        %v2128 = vmax.f32 %v2068, 0.0
        %v2129 = vmax.f32 %v2069, 0.0
        %v2130 = vmax.f32 %v2070, 0.0
        %v2131 = vmax.f32 %v2071, 0.0
        %v2132 = vmax.f32 %v2072, 0.0
        %v2133 = vmax.f32 %v2073, 0.0
        %v2134 = vmax.f32 %v2074, 0.0
        %v2135 = vmax.f32 %v2075, 0.0
        %v2136 = vmax.f32 %v2076, 0.0
        %v2137 = vmax.f32 %v2077, 0.0
        %v2138 = vmax.f32 %v2078, 0.0
        %v2139 = vmax.f32 %v2079, 0.0
        %v2140 = vmax.f32 %v2080, 0.0
        %v2141 = vmax.f32 %v2081, 0.0
        %v2142 = vmax.f32 %v2082, 0.0
        %v2143 = vmax.f32 %v2083, 0.0
        %v2144 = vmax.f32 %v2084, 0.0
        %v2145 = vmax.f32 %v2085, 0.0
        %v2146 = vmax.f32 %v2086, 0.0
        %v2147 = vmax.f32 %v2087, 0.0
        %v2148 = vmax.f32 %v2088, 0.0
        %v2149 = vmax.f32 %v2089, 0.0
        %v2150 = vmax.f32 %v2090, 0.0
        %v2151 = vmax.f32 %v2091, 0.0
        %v2152 = vmax.f32 %v2092, 0.0
        %v2153 = vmax.f32 %v2093, 0.0
        %v2154 = vmax.f32 %v2094, 0.0
        %v2155 = vmax.f32 %v2095, 0.0
        %v2156 = vmax.f32 %v2096, 0.0
        %v2157 = vmax.f32 %v2097, 0.0
        %v2158 = vmax.f32 %v2098, 0.0
        %v2159 = vmax.f32 %v2099, 0.0
        %v2160 = vmax.f32 %v2100, 0.0
        %v2161 = vmax.f32 %v2101, 0.0
        %v2162 = vmax.f32 %v2102, 0.0
        %v2163 = vmax.f32 %v2103, 0.0
        %v2164 = vmax.f32 %v2104, 0.0
        %v2165 = vmax.f32 %v2105, 0.0
        %v2166 = vmax.f32 %v2106, 0.0
        %v2167 = vmax.f32 %v2107, 0.0
        %v2168 = vmax.f32 %v2108, 0.0
        %v2169 = vmax.f32 %v2109, 0.0
        %v2170 = vmax.f32 %v2110, 0.0
        %v2171 = vpack.c.bf16 %v2112, %v2111
        %v2172 = vpack.c.bf16 %v2114, %v2113
        %v2173 = vpack.c.bf16 %v2116, %v2115
        %v2174 = vpack.c.bf16 %v2118, %v2117
        %v2175 = vpack.c.bf16 %v2120, %v2119
        %v2176 = vpack.c.bf16 %v2122, %v2121
        %v2177 = vpack.c.bf16 %v2124, %v2123
        %v2178 = vpack.c.bf16 %v2126, %v2125
        %v2179 = vpack.c.bf16 %v2128, %v2127
        %v2180 = vpack.c.bf16 %v2130, %v2129
        %v2181 = vpack.c.bf16 %v2132, %v2131
        %v2182 = vpack.c.bf16 %v2134, %v2133
        %v2183 = vpack.c.bf16 %v2136, %v2135
        %v2184 = vpack.c.bf16 %v2138, %v2137
        %v2185 = vpack.c.bf16 %v2140, %v2139
        %v2186 = vpack.c.bf16 %v2142, %v2141
        %v2187 = vpack.c.bf16 %v2144, %v2143
        %v2188 = vpack.c.bf16 %v2146, %v2145
        %v2189 = vpack.c.bf16 %v2148, %v2147
        %v2190 = vpack.c.bf16 %v2150, %v2149
        %v2191 = vpack.c.bf16 %v2152, %v2151
        %v2192 = vpack.c.bf16 %v2154, %v2153
        %v2193 = vpack.c.bf16 %v2156, %v2155
        %v2194 = vpack.c.bf16 %v2158, %v2157
        %v2195 = vpack.c.bf16 %v2160, %v2159
        %v2196 = vpack.c.bf16 %v2162, %v2161
        %v2197 = vpack.c.bf16 %v2164, %v2163
        %v2198 = vpack.c.bf16 %v2166, %v2165
        %v2199 = vpack.c.bf16 %v2168, %v2167
        %v2200 = vpack.c.bf16 %v2170, %v2169
        %v2231 = vunpack.c.l.b16 %v2171
        %v2232 = vunpack.c.h.b16 %v2171
        %v2233 = vunpack.c.l.b16 %v2172
        %v2234 = vunpack.c.h.b16 %v2172
        %v2235 = vunpack.c.l.b16 %v2173
        %v2236 = vunpack.c.h.b16 %v2173
        %v2237 = vunpack.c.l.b16 %v2174
        %v2238 = vunpack.c.h.b16 %v2174
        %v2239 = vunpack.c.l.b16 %v2175
        %v2240 = vunpack.c.h.b16 %v2175
        %v2241 = vunpack.c.l.b16 %v2176
        %v2242 = vunpack.c.h.b16 %v2176
        %v2243 = vunpack.c.l.b16 %v2177
        %v2244 = vunpack.c.h.b16 %v2177
        %v2245 = vunpack.c.l.b16 %v2178
        %v2246 = vunpack.c.h.b16 %v2178
        %v2247 = vunpack.c.l.b16 %v2179
        %v2248 = vunpack.c.h.b16 %v2179
        %v2249 = vunpack.c.l.b16 %v2180
        %v2250 = vunpack.c.h.b16 %v2180
        %v2251 = vunpack.c.l.b16 %v2181
        %v2252 = vunpack.c.h.b16 %v2181
        %v2253 = vunpack.c.l.b16 %v2182
        %v2254 = vunpack.c.h.b16 %v2182
        %v2255 = vunpack.c.l.b16 %v2183
        %v2256 = vunpack.c.h.b16 %v2183
        %v2257 = vunpack.c.l.b16 %v2184
        %v2258 = vunpack.c.h.b16 %v2184
        %v2259 = vunpack.c.l.b16 %v2185
        %v2260 = vunpack.c.h.b16 %v2185
        %v2261 = vunpack.c.l.b16 %v2186
        %v2262 = vunpack.c.h.b16 %v2186
        %v2263 = vunpack.c.l.b16 %v2187
        %v2264 = vunpack.c.h.b16 %v2187
        %v2265 = vunpack.c.l.b16 %v2188
        %v2266 = vunpack.c.h.b16 %v2188
        %v2267 = vunpack.c.l.b16 %v2189
        %v2268 = vunpack.c.h.b16 %v2189
        %v2269 = vunpack.c.l.b16 %v2190
        %v2270 = vunpack.c.h.b16 %v2190
        %v2271 = vunpack.c.l.b16 %v2191
        %v2272 = vunpack.c.h.b16 %v2191
        %v2273 = vunpack.c.l.b16 %v2192
        %v2274 = vunpack.c.h.b16 %v2192
        %v2275 = vunpack.c.l.b16 %v2193
        %v2276 = vunpack.c.h.b16 %v2193
        %v2277 = vunpack.c.l.b16 %v2194
        %v2278 = vunpack.c.h.b16 %v2194
        %v2279 = vunpack.c.l.b16 %v2195
        %v2280 = vunpack.c.h.b16 %v2195
        %v2281 = vunpack.c.l.b16 %v2196
        %v2282 = vunpack.c.h.b16 %v2196
        %v2283 = vunpack.c.l.b16 %v2197
        %v2284 = vunpack.c.h.b16 %v2197
        %v2285 = vunpack.c.l.b16 %v2198
        %v2286 = vunpack.c.h.b16 %v2198
        %v2287 = vunpack.c.l.b16 %v2199
        %v2288 = vunpack.c.h.b16 %v2199
        %v2289 = vunpack.c.l.b16 %v2200
        %v2290 = vunpack.c.h.b16 %v2200
        %v2291 = vpack.c.b16 %v2231, %v2231
        %v2292 = vpack.c.b16 %v2232, %v2232
        %v2293 = vpack.c.b16 %v2233, %v2233
        %v2294 = vpack.c.b16 %v2234, %v2234
        %v2295 = vpack.c.b16 %v2235, %v2235
        %v2296 = vpack.c.b16 %v2236, %v2236
        %v2297 = vpack.c.b16 %v2237, %v2237
        %v2298 = vpack.c.b16 %v2238, %v2238
        %v2299 = vpack.c.b16 %v2239, %v2239
        %v2300 = vpack.c.b16 %v2240, %v2240
        %v2301 = vpack.c.b16 %v2241, %v2241
        %v2302 = vpack.c.b16 %v2242, %v2242
        %v2303 = vpack.c.b16 %v2243, %v2243
        %v2304 = vpack.c.b16 %v2244, %v2244
        %v2305 = vpack.c.b16 %v2245, %v2245
        %v2306 = vpack.c.b16 %v2246, %v2246
        %v2307 = vpack.c.b16 %v2247, %v2247
        %v2308 = vpack.c.b16 %v2248, %v2248
        %v2309 = vpack.c.b16 %v2249, %v2249
        %v2310 = vpack.c.b16 %v2250, %v2250
        %v2311 = vpack.c.b16 %v2251, %v2251
        %v2312 = vpack.c.b16 %v2252, %v2252
        %v2313 = vpack.c.b16 %v2253, %v2253
        %v2314 = vpack.c.b16 %v2254, %v2254
        %v2315 = vpack.c.b16 %v2255, %v2255
        %v2316 = vpack.c.b16 %v2256, %v2256
        %v2317 = vpack.c.b16 %v2257, %v2257
        %v2318 = vpack.c.b16 %v2258, %v2258
        %v2319 = vpack.c.b16 %v2259, %v2259
        %v2320 = vpack.c.b16 %v2260, %v2260
        %v2321 = vpack.c.b16 %v2261, %v2261
        %v2322 = vpack.c.b16 %v2262, %v2262
        %v2323 = vpack.c.b16 %v2263, %v2263
        %v2324 = vpack.c.b16 %v2264, %v2264
        %v2325 = vpack.c.b16 %v2265, %v2265
        %v2326 = vpack.c.b16 %v2266, %v2266
        %v2327 = vpack.c.b16 %v2267, %v2267
        %v2328 = vpack.c.b16 %v2268, %v2268
        %v2329 = vpack.c.b16 %v2269, %v2269
        %v2330 = vpack.c.b16 %v2270, %v2270
        %v2331 = vpack.c.b16 %v2271, %v2271
        %v2332 = vpack.c.b16 %v2272, %v2272
        %v2333 = vpack.c.b16 %v2273, %v2273
        %v2334 = vpack.c.b16 %v2274, %v2274
        %v2335 = vpack.c.b16 %v2275, %v2275
        %v2336 = vpack.c.b16 %v2276, %v2276
        %v2337 = vpack.c.b16 %v2277, %v2277
        %v2338 = vpack.c.b16 %v2278, %v2278
        %v2339 = vpack.c.b16 %v2279, %v2279
        %v2340 = vpack.c.b16 %v2280, %v2280
        %v2341 = vpack.c.b16 %v2281, %v2281
        %v2342 = vpack.c.b16 %v2282, %v2282
        %v2343 = vpack.c.b16 %v2283, %v2283
        %v2344 = vpack.c.b16 %v2284, %v2284
        %v2345 = vpack.c.b16 %v2285, %v2285
        %v2346 = vpack.c.b16 %v2286, %v2286
        %v2347 = vpack.c.b16 %v2287, %v2287
        %v2348 = vpack.c.b16 %v2288, %v2288
        %v2349 = vpack.c.b16 %v2289, %v2289
        %v2350 = vpack.c.b16 %v2290, %v2290
        %vm2411 = vcmask 519168
        %2412 = vst.msk [vmem:[%s306] sm:$0xf] %vm2411, %v2291
        %2413 = vst.msk [vmem:[%s306 + $0x4] sm:$0xf] %vm2411, %v2292
        %2414 = vst.msk [vmem:[%s306 + $0x8] sm:$0xf] %vm2411, %v2293
        %2415 = vst.msk [vmem:[%s306 + $0xc] sm:$0xf] %vm2411, %v2294
        %2416 = vst.msk [vmem:[%s306 + $0x10] sm:$0xf] %vm2411, %v2295
        %2417 = vst.msk [vmem:[%s306 + $0x14] sm:$0xf] %vm2411, %v2296
        %2418 = vst.msk [vmem:[%s306 + $0x18] sm:$0xf] %vm2411, %v2297
        %2419 = vst.msk [vmem:[%s306 + $0x1c] sm:$0xf] %vm2411, %v2298
        %2420 = vst.msk [vmem:[%s306 + $0x20] sm:$0xf] %vm2411, %v2299
        %2421 = vst.msk [vmem:[%s306 + $0x24] sm:$0xf] %vm2411, %v2300
        %2422 = vst.msk [vmem:[%s306 + $0x28] sm:$0xf] %vm2411, %v2301
        %2423 = vst.msk [vmem:[%s306 + $0x2c] sm:$0xf] %vm2411, %v2302
        %2424 = vst.msk [vmem:[%s306 + $0x30] sm:$0xf] %vm2411, %v2303
        %2425 = vst.msk [vmem:[%s306 + $0x34] sm:$0xf] %vm2411, %v2304
        %2426 = vst.msk [vmem:[%s306 + $0x38] sm:$0xf] %vm2411, %v2305
        %2427 = vst.msk [vmem:[%s306 + $0x3c] sm:$0xf] %vm2411, %v2306
        %2428 = vst.msk [vmem:[%s306 + $0x40] sm:$0xf] %vm2411, %v2307
        %2429 = vst.msk [vmem:[%s306 + $0x44] sm:$0xf] %vm2411, %v2308
        %2430 = vst.msk [vmem:[%s306 + $0x48] sm:$0xf] %vm2411, %v2309
        %2431 = vst.msk [vmem:[%s306 + $0x4c] sm:$0xf] %vm2411, %v2310
        %2432 = vst.msk [vmem:[%s306 + $0x50] sm:$0xf] %vm2411, %v2311
        %2433 = vst.msk [vmem:[%s306 + $0x54] sm:$0xf] %vm2411, %v2312
        %2434 = vst.msk [vmem:[%s306 + $0x58] sm:$0xf] %vm2411, %v2313
        %2435 = vst.msk [vmem:[%s306 + $0x5c] sm:$0xf] %vm2411, %v2314
        %2436 = vst.msk [vmem:[%s306 + $0x60] sm:$0xf] %vm2411, %v2315
        %2437 = vst.msk [vmem:[%s306 + $0x64] sm:$0xf] %vm2411, %v2316
        %2438 = vst.msk [vmem:[%s306 + $0x68] sm:$0xf] %vm2411, %v2317
        %2439 = vst.msk [vmem:[%s306 + $0x6c] sm:$0xf] %vm2411, %v2318
        %2440 = vst.msk [vmem:[%s306 + $0x70] sm:$0xf] %vm2411, %v2319
        %2441 = vst.msk [vmem:[%s306 + $0x74] sm:$0xf] %vm2411, %v2320
        %2442 = vst.msk [vmem:[%s306 + $0x78] sm:$0xf] %vm2411, %v2321
        %2443 = vst.msk [vmem:[%s306 + $0x7c] sm:$0xf] %vm2411, %v2322
        %2444 = vst.msk [vmem:[%s306 + $0x80] sm:$0xf] %vm2411, %v2323
        %2445 = vst.msk [vmem:[%s306 + $0x84] sm:$0xf] %vm2411, %v2324
        %2446 = vst.msk [vmem:[%s306 + $0x88] sm:$0xf] %vm2411, %v2325
        %2447 = vst.msk [vmem:[%s306 + $0x8c] sm:$0xf] %vm2411, %v2326
        %2448 = vst.msk [vmem:[%s306 + $0x90] sm:$0xf] %vm2411, %v2327
        %2449 = vst.msk [vmem:[%s306 + $0x94] sm:$0xf] %vm2411, %v2328
        %2450 = vst.msk [vmem:[%s306 + $0x98] sm:$0xf] %vm2411, %v2329
        %2451 = vst.msk [vmem:[%s306 + $0x9c] sm:$0xf] %vm2411, %v2330
        %2452 = vst.msk [vmem:[%s306 + $0xa0] sm:$0xf] %vm2411, %v2331
        %2453 = vst.msk [vmem:[%s306 + $0xa4] sm:$0xf] %vm2411, %v2332
        %2454 = vst.msk [vmem:[%s306 + $0xa8] sm:$0xf] %vm2411, %v2333
        %2455 = vst.msk [vmem:[%s306 + $0xac] sm:$0xf] %vm2411, %v2334
        %2456 = vst.msk [vmem:[%s306 + $0xb0] sm:$0xf] %vm2411, %v2335
        %2457 = vst.msk [vmem:[%s306 + $0xb4] sm:$0xf] %vm2411, %v2336
        %2458 = vst.msk [vmem:[%s306 + $0xb8] sm:$0xf] %vm2411, %v2337
        %2459 = vst.msk [vmem:[%s306 + $0xbc] sm:$0xf] %vm2411, %v2338
        %2460 = vst.msk [vmem:[%s306 + $0xc0] sm:$0xf] %vm2411, %v2339
        %2461 = vst.msk [vmem:[%s306 + $0xc4] sm:$0xf] %vm2411, %v2340
        %2462 = vst.msk [vmem:[%s306 + $0xc8] sm:$0xf] %vm2411, %v2341
        %2463 = vst.msk [vmem:[%s306 + $0xcc] sm:$0xf] %vm2411, %v2342
        %2464 = vst.msk [vmem:[%s306 + $0xd0] sm:$0xf] %vm2411, %v2343
        %2465 = vst.msk [vmem:[%s306 + $0xd4] sm:$0xf] %vm2411, %v2344
        %2466 = vst.msk [vmem:[%s306 + $0xd8] sm:$0xf] %vm2411, %v2345
        %2467 = vst.msk [vmem:[%s306 + $0xdc] sm:$0xf] %vm2411, %v2346
        %2468 = vst.msk [vmem:[%s306 + $0xe0] sm:$0xf] %vm2411, %v2347
        %2469 = vst.msk [vmem:[%s306 + $0xe4] sm:$0xf] %vm2411, %v2348
        %2470 = vst.msk [vmem:[%s306 + $0xe8] sm:$0xf] %vm2411, %v2349
        %2471 = vst.msk [vmem:[%s306 + $0xec] sm:$0xf] %vm2411, %v2350
      $region44: #{matmul_affine.1} parent=35 // pred_fallthru
        _
      %s2472 = smul.u32 60, %s20
      %p2473 = scmp.lt.s32.totalorder %s2472, 899
      %s2474 = scalar_select %p2473, %s2472, 899
      %p2475 = scmp.lt.s32.totalorder %s21, 0
      %s2476 = scalar_select %p2475, %s21, 0
      %s2477 = sadd.s32 %s2476, %s2474
      %s2478 = smul.addr %s2477, 4
      %s2479 = scalar_lea.vmem %s4, %s2478
      // Predicated region
      $region45: #{matmul_affine.1} parent=35 // pred_check
        %p2480 = pneg %p162
      $region46: #{matmul_affine.1} parent=35 // pred_check_branch
        %2482 = sbr.rel (%p2480) target = $region48
      $region47: #{matmul_affine.1} parent=35 // pred_region
        %s2483 = smul.u32 60, %s20
      $region48: #{matmul_affine.1} parent=35 // pred_fallthru
        _
    $region36: #{matmul_affine.1} parent=5 // pred_fallthru
      _
    %p2484 = scmp.le.s32.totalorder 2, %s10
    // Predicated region
    $region49: #{matmul_affine.1} parent=5 // pred_check
      %p2485 = pneg %p2484
    $region50: #{matmul_affine.1} parent=5 // pred_check_branch
      %2487 = sbr.rel (%p2485) target = $region52
    $region51: #{matmul_affine.1} parent=5 // pred_region
      %s2488 = ssub.s32 %s10, 2
      // Predicated region
      $region53: #{matmul_affine.1} parent=51 // pred_check
        %p2489 = pneg %p168
      $region54: #{matmul_affine.1} parent=51 // pred_check_branch
        %2491 = sbr.rel (%p2489) target = $region56
      $region55: #{matmul_affine.1} parent=51 // pred_region
        %s2492 = smul.u32 60, %s23
        %p2493 = scmp.lt.s32.totalorder %s2492, 899
        %s2494 = scalar_select %p2493, %s2492, 899
        %p2495 = scmp.lt.s32.totalorder %s24, 0
        %s2496 = scalar_select %p2495, %s24, 0
        %s2497 = sadd.s32 %s2496, %s2494
        %s2498 = smul.addr %s2497, 4
        %s2499 = scalar_lea.vmem %s4, %s2498
      $region56: #{matmul_affine.1} parent=51 // pred_fallthru
        _
    $region52: #{matmul_affine.1} parent=5 // pred_fallthru
      _
  $region6: #{matmul_affine.1} parent=0 // loop_footer
    %s14 = sadd.s32 1, %s10
  $region7: #{matmul_affine.1} parent=0 // loop_footer_branch
    %9 = sbr.rel target = $region3
  $region8: #{matmul_affine.1} parent=0 // loop_exit
    _

</llo_original>
